<compile_context>
chip_gen: v7x
topology: tpu7x:2x2x1
jax: 0.10.0
libtpu: 0.0.40
codegen_flags: <defaults>
</compile_context>

<pallas_src>
import functools
import math

import jax
import jax.numpy as jnp
from jax.experimental import pallas as pl
from jax.experimental.pallas import tpu as pltpu


# ---------------------------------------------------------------------------
# Tiling helpers
# ---------------------------------------------------------------------------
def _round_up(x, m):
    return ((x + m - 1) // m) * m


def _pick_tile(dim, max_tile, unit):
    """Largest divisor of `dim` that is a multiple of `unit` and <= max_tile,
    else the full dimension (full-extent blocks are always legal)."""
    t = (max_tile // unit) * unit
    while t >= unit:
        if dim % t == 0:
            return t
        t -= unit
    return dim


def _tiles_for(M, N, K):
    """Shared tile selection for the Pallas kernel and the chunk-matched ref."""
    TM = _pick_tile(M, 512, 8)
    TN = _pick_tile(N, 512, 128)
    TK = _pick_tile(K, 1024, 128)
    # v7x megacore: keep at least 2 independent (i, j) tiles when possible so
    # both TensorCores get work.
    if (M // TM) * (N // TN) < 2 and TM >= 16 and M % TM == 0:
        tm2 = _pick_tile(M, TM // 2, 8)
        if tm2 < TM and M % tm2 == 0:
            TM = tm2
    if (M // TM) * (N // TN) < 2 and TN >= 256 and N % TN == 0:
        tn2 = _pick_tile(N, TN // 2, 128)
        if tn2 < TN and N % tn2 == 0:
            TN = tn2
    return TM, TN, TK


# ---------------------------------------------------------------------------
# Fused (im2col-matmul + folded-BN shift + optional residual + ReLU) kernel
# ---------------------------------------------------------------------------
def _matmul_bn_kernel(x_ref, w_ref, shift_ref, *refs, relu, has_residual):
    if has_residual:
        res_ref, o_ref, acc_ref = refs
    else:
        o_ref, acc_ref = refs

    k = pl.program_id(2)

    @pl.when(k == 0)
    def _():
        acc_ref[...] = jnp.zeros_like(acc_ref)

    # bf16 x bf16 on the MXU, f32 accumulation in VMEM scratch.
    acc_ref[...] += jnp.dot(x_ref[...], w_ref[...],
                            preferred_element_type=jnp.float32)

    @pl.when(k == pl.num_programs(2) - 1)
    def _():
        # Epilogue runs once per (i, j) tile: folded-BN shift, residual, ReLU.
        y = acc_ref[...] + shift_ref[...]
        if has_residual:
            y = y + res_ref[...].astype(jnp.float32)
        if relu:
            y = jnp.maximum(y, 0.0)
        o_ref[...] = y.astype(o_ref.dtype)


def matmul_bn_act(x, w, shift, residual=None, *, relu):
    """relu?((x @ w) + shift [+ residual]) with bf16 streaming, f32 accumulation.

    x:        [M, K]  bfloat16 (im2col patches, K padded to mult. of 128)
    w:        [K, N]  bfloat16 (BN scale already folded in)
    shift:    [1, N]  float32  (folded eval-mode BatchNorm shift)
    residual: [M, N]  bfloat16 or None
    returns:  [M, N]  bfloat16
    """
    M, K = x.shape
    K2, N = w.shape
    assert K == K2, (K, K2)

    TM, TN, TK = _tiles_for(M, N, K)
    grid = (M // TM, N // TN, K // TK)

    in_specs = [
        pl.BlockSpec((TM, TK), lambda i, j, k: (i, k)),
        pl.BlockSpec((TK, TN), lambda i, j, k: (k, j)),
        pl.BlockSpec((1, TN), lambda i, j, k: (0, j)),
    ]
    args = [x, w, shift]
    has_residual = residual is not None
    if has_residual:
        in_specs.append(pl.BlockSpec((TM, TN), lambda i, j, k: (i, j)))
        args.append(residual)

    kernel = functools.partial(_matmul_bn_kernel, relu=relu,
                               has_residual=has_residual)

    bytes_accessed = 2 * M * K + 2 * K * N + 2 * M * N + 4 * N
    if has_residual:
        bytes_accessed += 2 * M * N
    cost = pl.CostEstimate(flops=2 * M * N * K, transcendentals=0,
                           bytes_accessed=bytes_accessed)

    return pl.pallas_call(
        kernel,
        out_shape=jax.ShapeDtypeStruct((M, N), jnp.bfloat16),
        grid_spec=pltpu.PrefetchScalarGridSpec(
            num_scalar_prefetch=0,
            grid=grid,
            in_specs=in_specs,
            out_specs=pl.BlockSpec((TM, TN), lambda i, j, k: (i, j)),
            scratch_shapes=[pltpu.VMEM((TM, TN), jnp.float32)],
        ),
        compiler_params=pltpu.CompilerParams(
            dimension_semantics=("parallel", "parallel", "arbitrary"),
        ),
        cost_estimate=cost,
    )(*args)


def matmul_bn_act_ref(x, w, shift, residual=None, *, relu):
    """Pure-JAX reference with the SAME K-chunked f32 accumulation order and
    the same bf16 cast points as the Pallas kernel."""
    M, K = x.shape
    _, N = w.shape
    _, _, TK = _tiles_for(M, N, K)
    acc = jnp.zeros((M, N), jnp.float32)
    for k0 in range(0, K, TK):
        acc = acc + jnp.dot(x[:, k0:k0 + TK], w[k0:k0 + TK, :],
                            preferred_element_type=jnp.float32)
    y = acc + shift
    if residual is not None:
        y = y + residual.astype(jnp.float32)
    if relu:
        y = jnp.maximum(y, 0.0)
    return y.astype(jnp.bfloat16)


# ---------------------------------------------------------------------------
# Pooling kernels (real grid, tiled over M / C)
# ---------------------------------------------------------------------------
def _maxpool_kernel(*refs):
    o_ref = refs[-1]
    acc = refs[0][...]
    for r in refs[1:-1]:
        acc = jnp.maximum(acc, r[...])
    o_ref[...] = acc


def _avgpool_kernel(x_ref, o_ref):
    o_ref[...] = jnp.mean(x_ref[...].astype(jnp.float32), axis=1)


def max_pool_3x3_s2(x, *, use_pallas):
    n, h, w, c = x.shape
    pad, ksize, stride = 1, 3, 2
    neg = jnp.finfo(x.dtype).min
    xp = jnp.pad(x, ((0, 0), (pad, pad), (pad, pad), (0, 0)), constant_values=neg)
    hp, wp = h + 2 * pad, w + 2 * pad
    ho = (hp - ksize) // stride + 1
    wo = (wp - ksize) // stride + 1
    taps = []
    for di in range(ksize):
        for dj in range(ksize):
            taps.append(
                xp[:, di:di + stride * (ho - 1) + 1:stride,
                      dj:dj + stride * (wo - 1) + 1:stride, :].reshape(n * ho * wo, c))
    if not use_pallas:
        out = taps[0]
        for t in taps[1:]:
            out = jnp.maximum(out, t)
        return out.reshape(n, ho, wo, c)

    M = n * ho * wo
    TM = _pick_tile(M, 1024, 8)
    out = pl.pallas_call(
        _maxpool_kernel,
        out_shape=jax.ShapeDtypeStruct((M, c), x.dtype),
        grid_spec=pltpu.PrefetchScalarGridSpec(
            num_scalar_prefetch=0,
            grid=(M // TM,),
            in_specs=[pl.BlockSpec((TM, c), lambda i: (i, 0)) for _ in range(9)],
            out_specs=pl.BlockSpec((TM, c), lambda i: (i, 0)),
        ),
        compiler_params=pltpu.CompilerParams(dimension_semantics=("parallel",)),
    )(*taps)
    return out.reshape(n, ho, wo, c)


def global_avg_pool(x, *, use_pallas):
    n, h, w, c = x.shape
    xr = x.reshape(n, h * w, c)
    if not use_pallas:
        return jnp.mean(xr.astype(jnp.float32), axis=1)
    TC = _pick_tile(c, 512, 128)
    return pl.pallas_call(
        _avgpool_kernel,
        out_shape=jax.ShapeDtypeStruct((n, c), jnp.float32),
        grid_spec=pltpu.PrefetchScalarGridSpec(
            num_scalar_prefetch=0,
            grid=(c // TC,),
            in_specs=[pl.BlockSpec((n, h * w, TC), lambda j: (0, 0, j))],
            out_specs=pl.BlockSpec((n, TC), lambda j: (0, j)),
        ),
        compiler_params=pltpu.CompilerParams(dimension_semantics=("parallel",)),
    )(xr)


# ---------------------------------------------------------------------------
# Layout helpers (data movement only — all FLOPs are in the Pallas kernels)
# ---------------------------------------------------------------------------
def _im2col(x, ksize, stride, pad):
    """x: [N, H, W, C] -> patches [N*Ho*Wo, ksize*ksize*C], taps ordered (kh, kw, c)."""
    n, h, w, c = x.shape
    if pad > 0:
        x = jnp.pad(x, ((0, 0), (pad, pad), (pad, pad), (0, 0)))
    hp, wp = h + 2 * pad, w + 2 * pad
    ho = (hp - ksize) // stride + 1
    wo = (wp - ksize) // stride + 1
    taps = []
    for di in range(ksize):
        for dj in range(ksize):
            taps.append(
                x[:, di:di + stride * (ho - 1) + 1:stride,
                     dj:dj + stride * (wo - 1) + 1:stride, :])
    p = jnp.stack(taps, axis=3)                       # [N, Ho, Wo, k*k, C]
    return p.reshape(n * ho * wo, ksize * ksize * c), (n, ho, wo)


def conv_bn(x, p, *, ksize, stride, pad, relu, residual=None, use_pallas):
    """Conv (no bias) + eval-mode BN (+ residual) (+ ReLU), NHWC activations."""
    patches, (n, ho, wo) = _im2col(x, ksize, stride, pad)
    patches = patches.astype(jnp.bfloat16)            # activations streamed as bf16
    k_pad = p["w"].shape[0]
    if patches.shape[1] < k_pad:                      # align K to multiple of 128
        patches = jnp.pad(patches, ((0, 0), (0, k_pad - patches.shape[1])))
    res2d = None
    if residual is not None:
        res2d = residual.reshape(-1, residual.shape[-1]).astype(jnp.bfloat16)
    fn = matmul_bn_act if use_pallas else matmul_bn_act_ref
    out = fn(patches, p["w"], p["shift"], res2d, relu=relu)
    return out.reshape(n, ho, wo, -1)


# ---------------------------------------------------------------------------
# ResNet50 parameters & forward
# ---------------------------------------------------------------------------
_LAYER_CFG = ((64, 3), (128, 4), (256, 6), (512, 3))      # (mid_channels, num_blocks)


def _make_conv_bn(key, cin, cout, ksize, gamma_scale=1.0):
    kw, kg, kb, km = jax.random.split(key, 4)
    fan_in = cin * ksize * ksize
    # He-normal conv weights; eval-mode BN folded into the weights (scale) and a
    # per-channel shift.  gamma_scale < 1 on the last BN of a block keeps the
    # residual-branch contribution small so activations stay well conditioned.
    w = jax.random.normal(kw, (fan_in, cout), jnp.float32) * math.sqrt(2.0 / fan_in)
    eps = 1e-5
    gamma = gamma_scale * (1.0 + 0.1 * jax.random.normal(kg, (cout,), jnp.float32))
    beta = 0.05 * jax.random.normal(kb, (cout,), jnp.float32)
    mean = 0.05 * jax.random.normal(km, (cout,), jnp.float32)
    var = jnp.ones((cout,), jnp.float32)
    scale = gamma / jnp.sqrt(var + eps)
    shift = (beta - mean * scale).reshape(1, cout)
    w_folded = w * scale[None, :]                      # fold BN scale into weights
    k_pad = _round_up(fan_in, 128)                     # zero-pad K to mult. of 128
    if k_pad > fan_in:
        w_folded = jnp.pad(w_folded, ((0, k_pad - fan_in), (0, 0)))
    return {"w": w_folded.astype(jnp.bfloat16), "shift": shift}


def init_resnet50(key):
    n_convs = 1 + sum(3 * nb + 1 for _, nb in _LAYER_CFG)
    keys = iter(jax.random.split(key, n_convs))
    params = {"conv1": _make_conv_bn(next(keys), 3, 64, 7), "layers": []}
    cin = 64
    for mid, nblocks in _LAYER_CFG:
        cout = mid * 4
        blocks = []
        for bi in range(nblocks):
            block = {
                "conv1": _make_conv_bn(next(keys), cin, mid, 1),
                "conv2": _make_conv_bn(next(keys), mid, mid, 3),
                "conv3": _make_conv_bn(next(keys), mid, cout, 1, gamma_scale=0.25),
                "downsample": _make_conv_bn(next(keys), cin, cout, 1) if bi == 0 else None,
            }
            blocks.append(block)
            cin = cout
        params["layers"].append(blocks)
    return params


def resnet50_forward(params, x_nchw, *, use_pallas):
    x = jnp.transpose(x_nchw, (0, 2, 3, 1)).astype(jnp.float32)   # NCHW -> NHWC

    # stem: conv7x7/2 + bn + relu, then maxpool3x3/2
    x = conv_bn(x, params["conv1"], ksize=7, stride=2, pad=3, relu=True,
                use_pallas=use_pallas)
    x = max_pool_3x3_s2(x, use_pallas=use_pallas)

    # layer1..layer4, bottleneck blocks (stride on the 3x3 conv, torchvision-style)
    for li, blocks in enumerate(params["layers"]):
        for bi, block in enumerate(blocks):
            s = (1 if li == 0 else 2) if bi == 0 else 1
            identity = x
            out = conv_bn(x, block["conv1"], ksize=1, stride=1, pad=0, relu=True,
                          use_pallas=use_pallas)
            out = conv_bn(out, block["conv2"], ksize=3, stride=s, pad=1, relu=True,
                          use_pallas=use_pallas)
            if block["downsample"] is not None:
                identity = conv_bn(x, block["downsample"], ksize=1, stride=s, pad=0,
                                   relu=False, use_pallas=use_pallas)
            # final 1x1 conv with fused BN + residual add + ReLU
            out = conv_bn(out, block["conv3"], ksize=1, stride=1, pad=0, relu=True,
                          residual=identity, use_pallas=use_pallas)
            x = out

    # global average pool + flatten -> [N, 2048] float32
    return global_avg_pool(x, use_pallas=use_pallas)


if __name__ == "__main__":
    key = jax.random.PRNGKey(0)
    k_params, k_x, k1, k2, k3, k4 = jax.random.split(key, 6)

    # ---- unit test of the fused matmul kernel (multi-i, multi-k grid) ----
    xa = jax.random.normal(k1, (256, 2304), jnp.float32).astype(jnp.bfloat16)
    wb = (0.02 * jax.random.normal(k2, (2304, 256), jnp.float32)).astype(jnp.bfloat16)
    sh = 0.1 * jax.random.normal(k3, (1, 256), jnp.float32)
    rs = jax.random.normal(k4, (256, 256), jnp.float32).astype(jnp.bfloat16)
    got = jax.block_until_ready(matmul_bn_act(xa, wb, sh, rs, relu=True))
    want = jax.block_until_ready(matmul_bn_act_ref(xa, wb, sh, rs, relu=True))
    unit_err = float(jnp.max(jnp.abs(got.astype(jnp.float32) - want.astype(jnp.float32))))
    assert jnp.allclose(got.astype(jnp.float32), want.astype(jnp.float32),
                        atol=2e-2, rtol=2e-2), unit_err

    # ---- full ResNet50 forward ----
    params = init_resnet50(k_params)
    x = jax.random.normal(k_x, (2, 3, 64, 64), jnp.float32)   # small spatial input

    fwd_pallas = jax.jit(functools.partial(resnet50_forward, use_pallas=True))
    fwd_ref = jax.jit(functools.partial(resnet50_forward, use_pallas=False))

    feats = jax.block_until_ready(fwd_pallas(params, x))
    ref = jax.block_until_ready(fwd_ref(params, x))

    assert feats.shape == (2, 2048), feats.shape
    assert bool(jnp.all(jnp.isfinite(feats)))
    f32 = feats.astype(jnp.float32)
    r32 = ref.astype(jnp.float32)
    max_abs = float(jnp.max(jnp.abs(f32 - r32)))
    assert jnp.allclose(f32, r32, atol=5e-2, rtol=5e-2), max_abs

    print("KERNEL_OK")
</pallas_src>

<mosaic_0001>
module attributes {stable_mosaic.version = 11 : i64} {
  func.func @_matmul_bn_kernel(%arg0: i32, %arg1: i32, %arg2: i32, %arg3: memref<128x768xbf16, #tpu.memory_space<vmem>>, %arg4: memref<768x256xbf16, #tpu.memory_space<vmem>>, %arg5: memref<1x256xf32, #tpu.memory_space<vmem>>, %arg6: memref<128x256xbf16, #tpu.memory_space<vmem>>, %arg7: memref<128x256xbf16, #tpu.memory_space<vmem>>, %arg8: memref<128x256xf32, #tpu.memory_space<vmem>>) attributes {dimension_semantics = [#tpu.dimension_semantics<parallel>, #tpu.dimension_semantics<parallel>, #tpu.dimension_semantics<arbitrary>], iteration_bounds = array<i64: 2, 1, 3>, scalar_prefetch = 0 : i64, scratch_operands = 1 : i64, tpu.core_type = #tpu.core_type<tc>, window_params = [{transform_indices = @transform_0, window_bounds = array<i64: 128, 768>}, {transform_indices = @transform_1, window_bounds = array<i64: 768, 256>}, {transform_indices = @transform_2, window_bounds = array<i64: 1, 256>}, {transform_indices = @transform_3, window_bounds = array<i64: 128, 256>}, {transform_indices = @transform_4, window_bounds = array<i64: 128, 256>}]} {
    %c0_i32 = arith.constant 0 : i32
    %0 = arith.cmpi eq, %arg2, %c0_i32 : i32
    %1 = arith.extui %0 : i1 to i32
    %c0_i32_0 = arith.constant 0 : i32
    %2 = arith.cmpi ne, %1, %c0_i32_0 : i32
    scf.if %2 {
      %cst_9 = arith.constant 0.000000e+00 : f32
      %12 = vector.broadcast %cst_9 : f32 to vector<128x256xf32>
      %c0_10 = arith.constant 0 : index
      %c0_11 = arith.constant 0 : index
      %13 = vector.load %arg8[%c0_10, %c0_11] : memref<128x256xf32, #tpu.memory_space<vmem>>, vector<128x256xf32>
      tpu.vector_store %arg8[%c0_10, %c0_11], %12 {strides = array<i32>} : memref<128x256xf32, #tpu.memory_space<vmem>>, vector<128x256xf32>,
    } else {
    }
    %c0 = arith.constant 0 : index
    %c0_1 = arith.constant 0 : index
    %3 = vector.load %arg8[%c0, %c0_1] : memref<128x256xf32, #tpu.memory_space<vmem>>, vector<128x256xf32>
    %c0_2 = arith.constant 0 : index
    %c0_3 = arith.constant 0 : index
    %4 = vector.load %arg3[%c0_2, %c0_3] : memref<128x768xbf16, #tpu.memory_space<vmem>>, vector<128x768xbf16>
    %c0_4 = arith.constant 0 : index
    %c0_5 = arith.constant 0 : index
    %5 = vector.load %arg4[%c0_4, %c0_5] : memref<768x256xbf16, #tpu.memory_space<vmem>>, vector<768x256xbf16>
    %cst = arith.constant dense<0.000000e+00> : vector<128x256xf32>
    %6 = tpu.matmul %4, %5, %cst {dimension_numbers = #tpu.dot_dimension_numbers<[1], [0], [0], [1], [0, 0, 1, 1], [], []>} : vector<128x768xbf16>, vector<768x256xbf16>, vector<128x256xf32> -> vector<128x256xf32>
    %7 = arith.addf %3, %6 : vector<128x256xf32>
    %c0_6 = arith.constant 0 : index
    %c0_7 = arith.constant 0 : index
    %8 = vector.load %arg8[%c0_6, %c0_7] : memref<128x256xf32, #tpu.memory_space<vmem>>, vector<128x256xf32>
    tpu.vector_store %arg8[%c0_6, %c0_7], %7 {strides = array<i32>} : memref<128x256xf32, #tpu.memory_space<vmem>>, vector<128x256xf32>,
    %c2_i32 = arith.constant 2 : i32
    %9 = arith.cmpi eq, %arg2, %c2_i32 : i32
    %10 = arith.extui %9 : i1 to i32
    %c0_i32_8 = arith.constant 0 : i32
    %11 = arith.cmpi ne, %10, %c0_i32_8 : i32
    scf.if %11 {
      %c0_9 = arith.constant 0 : index
      %c0_10 = arith.constant 0 : index
      %12 = vector.load %arg8[%c0_9, %c0_10] : memref<128x256xf32, #tpu.memory_space<vmem>>, vector<128x256xf32>
      %c0_11 = arith.constant 0 : index
      %c0_12 = arith.constant 0 : index
      %13 = vector.load %arg5[%c0_11, %c0_12] : memref<1x256xf32, #tpu.memory_space<vmem>>, vector<1x256xf32>
      %14 = vector.broadcast %13 : vector<1x256xf32> to vector<128x256xf32>
      %15 = arith.addf %12, %14 : vector<128x256xf32>
      %c0_13 = arith.constant 0 : index
      %c0_14 = arith.constant 0 : index
      %16 = vector.load %arg6[%c0_13, %c0_14] : memref<128x256xbf16, #tpu.memory_space<vmem>>, vector<128x256xbf16>
      %17 = arith.extf %16 : vector<128x256xbf16> to vector<128x256xf32>
      %18 = arith.addf %15, %17 : vector<128x256xf32>
      %cst_15 = arith.constant 0.000000e+00 : f32
      %19 = vector.broadcast %cst_15 : f32 to vector<128x256xf32>
      %20 = arith.maximumf %18, %19 : vector<128x256xf32>
      %21 = arith.truncf %20 : vector<128x256xf32> to vector<128x256xbf16>
      %c0_16 = arith.constant 0 : index
      %c0_17 = arith.constant 0 : index
      %22 = vector.load %arg7[%c0_16, %c0_17] : memref<128x256xbf16, #tpu.memory_space<vmem>>, vector<128x256xbf16>
      tpu.vector_store %arg7[%c0_16, %c0_17], %21 {strides = array<i32>} : memref<128x256xbf16, #tpu.memory_space<vmem>>, vector<128x256xbf16>,
    } else {
    }
    return
  }
  func.func @transform_0(%arg0: i32, %arg1: i32, %arg2: i32) -> (i32, i32) {
    %c0_i32 = arith.constant 0 : i32
    return %arg0, %arg2 : i32, i32
  }
  func.func @transform_1(%arg0: i32, %arg1: i32, %arg2: i32) -> (i32, i32) {
    %c0_i32 = arith.constant 0 : i32
    return %arg2, %arg1 : i32, i32
  }
  func.func @transform_2(%arg0: i32, %arg1: i32, %arg2: i32) -> (i32, i32) {
    %c0_i32 = arith.constant 0 : i32
    %c0_i32_0 = arith.constant 0 : i32
    return %c0_i32, %arg1 : i32, i32
  }
  func.func @transform_3(%arg0: i32, %arg1: i32, %arg2: i32) -> (i32, i32) {
    %c0_i32 = arith.constant 0 : i32
    return %arg0, %arg1 : i32, i32
  }
  func.func @transform_4(%arg0: i32, %arg1: i32, %arg2: i32) -> (i32, i32) {
    %c0_i32 = arith.constant 0 : i32
    return %arg0, %arg1 : i32, i32
  }
}

</mosaic_0001>

<llo_original>
// kernel: tpu_custom_call.1
$region0: #{tpu_custom_call.1}
  #allocation0 [shape = 'u32[]', space=smem, size = 0x4, offset = 0x4, fixed_abs, tag = 'smem constant byte address 0x4 - core index']
  #allocation1 [shape = 'u32[144,128]{1,0:T(1,128)}', space=vmem, size = 0x12000, scoped, tag = 'internal scratch']
  #allocation2 [shape = 'f32[128,256]{1,0:T(8,128)}', space=vmem, size = 0x20000, scoped, tag = 'scratch operand']
  %s0 = inlined_call_operand.hbm [shape: bf16[256,2304], index: 0, kind: input, shape index: {}]
  %s1 = inlined_call_operand.hbm [shape: bf16[2304,256], index: 1, kind: input, shape index: {}]
  %s2 = inlined_call_operand.hbm [shape: f32[1,256], index: 2, kind: input, shape index: {}]
  %s3 = inlined_call_operand.hbm [shape: bf16[256,256], index: 3, kind: input, shape index: {}]
  %s4 = inlined_call_operand.hbm [shape: bf16[256,256], index: 4, kind: output, shape index: {}]
  %s5 = sld [smem:[#allocation0]]
  $region73: #{tpu_custom_call.1} parent=0
    _
  %s7 = ssub.s32 1, %s5
  %s8 = scalar_select 0, %s7, %s5
  $region1: #{tpu_custom_call.1} parent=0
    #allocation3 [shape = 'u8[393216]{0}', space=vmem, size = 0x60000, scoped, tag = 'input window, operand 0']
    #allocation4 [shape = 's32[2]{0}', space=sflag, size = 0x8, scoped, tag = 'scoped memory for tpu_custom_call.1']
    #allocation5 [shape = 's32[2]{0}', space=sflag, size = 0x8, scoped, tag = 'scoped memory for tpu_custom_call.1']
    #allocation6 [shape = 'u8[786432]{0}', space=vmem, size = 0xc0000, scoped, tag = 'input window, operand 1']
    #allocation7 [shape = 's32[2]{0}', space=sflag, size = 0x8, scoped, tag = 'scoped memory for tpu_custom_call.1']
    #allocation8 [shape = 'u8[1024]{0}', space=vmem, size = 0x400, scoped, tag = 'input window, operand 2, single buffered']
    #allocation9 [shape = 'u8[131072]{0}', space=vmem, size = 0x20000, scoped, tag = 'input window, operand 3']
    #allocation10 [shape = 's32[2]{0}', space=sflag, size = 0x8, scoped, tag = 'scoped memory for tpu_custom_call.1']
    #allocation11 [shape = 'u8[131072]{0}', space=vmem, size = 0x20000, scoped, tag = 'output window, operand 0']
    %9 = vsyncpa [#allocation4], 0
    %s10 = scalar_lea.sflag [#allocation4], 1
    %11 = vsyncpa %s10, 0
    %12 = vsyncpa [#allocation7], 0
    %s13 = scalar_lea.sflag [#allocation7], 1
    %14 = vsyncpa %s13, 0
    %15 = vsyncpa [#allocation10], 0
    %s16 = scalar_lea.sflag [#allocation10], 1
    %17 = vsyncpa %s16, 0
    %18 = vsyncpa [#allocation5], 0
    %s19 = scalar_lea.sflag [#allocation5], 1
    %20 = vsyncpa %s19, 0
    loop: start=0, step=1, limit=8
    $region2: #{tpu_custom_call.1} parent=1 // loop_pre_header
      _
    $region3: #{tpu_custom_call.1} parent=1 // loop_header
      %s22 = sphi 0, %s26
      %p23 = scmp.ge.s32.totalorder %s22, 8
      %s29 = sphi 0, %s48
      %s30 = sphi 0, %s44
      %s31 = sphi 0, %s40
      %s32 = sphi 0, %s29
      %s33 = sphi 0, %s30
      %s34 = sphi 0, %s31
      %s35 = sphi 0, %s32
      %s36 = sphi 0, %s33
      %s37 = sphi 0, %s34
      %s53 = sphi 0, %s55
      %s56 = sphi 0, %s53
      %s57 = sphi 0, %s56
      %s73 = sphi 0, %s57
      %s81 = sphi 0, %s83
      %s84 = sphi 0, %s81
      %s85 = sphi 0, %s84
      %s101 = sphi 0, %s85
      %s107 = sphi 0, %s109
      %s110 = sphi 0, %s107
      %s111 = sphi 0, %s110
      %s127 = sphi 0, %s111
      %s135 = sphi 0, %s137
      %s138 = sphi 0, %s135
      %s139 = sphi 0, %s138
      %s155 = sphi 0, %s139
      %s163 = sphi 0, %s165
      %s166 = sphi 0, %s163
      %s167 = sphi 0, %s166
      %s183 = sphi 0, %s167
    $region4: #{tpu_custom_call.1} parent=1 // loop_header_branch
      %25 = sbr.rel (%p23) target = $region8
    $region5: #{tpu_custom_call.1} parent=1 // loop_body
      %s27 = ssub.s32 %s22, 1
      %s28 = ssub.s32 %s22, 2
      %s38 = sadd.s32 1, %s31
      %p39 = scmp.ge.s32.totalorder %s38, 3
      %s40 = scalar_select %p39, 0, %s38
      %s41 = sadd.s32 1, %s30
      %s42 = scalar_select %p39, %s41, %s30
      %p43 = scmp.ge.s32.totalorder %s42, 1
      %s44 = scalar_select %p43, 0, %s42
      %s45 = sadd.s32 1, %s29
      %s46 = scalar_select %p43, %s45, %s29
      %p47 = scmp.ge.s32.totalorder %s46, 2
      %s48 = scalar_select %p47, 0, %s46
      %s49 = ssub.s32 %s29, %s48
      %s50 = ssub.s32 %s31, %s40
      %s51 = sor.u32 %s49, %s50
      %p52 = scmp.eq.s32.totalorder %s51, 0
      %s54 = sadd.s32 %s53, 1
      %s55 = scalar_select %p52, %s53, %s54
      %p58 = pneg %p52
      %p59 = scmp.eq.s32.totalorder %s22, 5
      %p60 = por %p58, %p59
      %p61 = scmp.ne.s32.totalorder %s53, %s56
      %p62 = scmp.eq.s32.totalorder %s22, 0
      %p63 = por %p61, %p62
      %p64 = scmp.ne.s32.totalorder %s53, %s56
      %p65 = scmp.eq.s32.totalorder %s27, 5
      %p66 = por %p64, %p65
      %p67 = scmp.ne.s32.totalorder %s56, %s57
      %p68 = scmp.eq.s32.totalorder %s27, 0
      %p69 = por %p67, %p68
      %p70 = scmp.ne.s32.totalorder %s56, %s57
      %p71 = scmp.eq.s32.totalorder %s28, 5
      %p72 = por %p70, %p71
      %p74 = scmp.ne.s32.totalorder %s57, %s73
      %p75 = scmp.eq.s32.totalorder %s28, 0
      %p76 = por %p74, %p75
      %s77 = ssub.s32 %s31, %s40
      %s78 = ssub.s32 %s30, %s44
      %s79 = sor.u32 %s77, %s78
      %p80 = scmp.eq.s32.totalorder %s79, 0
      %s82 = sadd.s32 %s81, 1
      %s83 = scalar_select %p80, %s81, %s82
      %p86 = pneg %p80
      %p87 = scmp.eq.s32.totalorder %s22, 5
      %p88 = por %p86, %p87
      %p89 = scmp.ne.s32.totalorder %s81, %s84
      %p90 = scmp.eq.s32.totalorder %s22, 0
      %p91 = por %p89, %p90
      %p92 = scmp.ne.s32.totalorder %s81, %s84
      %p93 = scmp.eq.s32.totalorder %s27, 5
      %p94 = por %p92, %p93
      %p95 = scmp.ne.s32.totalorder %s84, %s85
      %p96 = scmp.eq.s32.totalorder %s27, 0
      %p97 = por %p95, %p96
      %p98 = scmp.ne.s32.totalorder %s84, %s85
      %p99 = scmp.eq.s32.totalorder %s28, 5
      %p100 = por %p98, %p99
      %p102 = scmp.ne.s32.totalorder %s85, %s101
      %p103 = scmp.eq.s32.totalorder %s28, 0
      %p104 = por %p102, %p103
      %s105 = ssub.s32 %s30, %s44
      %p106 = scmp.eq.s32.totalorder %s105, 0
      %s108 = sadd.s32 %s107, 1
      %s109 = scalar_select %p106, %s107, %s108
      %p112 = pneg %p106
      %p113 = scmp.eq.s32.totalorder %s22, 5
      %p114 = por %p112, %p113
      %p115 = scmp.ne.s32.totalorder %s107, %s110
      %p116 = scmp.eq.s32.totalorder %s22, 0
      %p117 = por %p115, %p116
      %p118 = scmp.ne.s32.totalorder %s107, %s110
      %p119 = scmp.eq.s32.totalorder %s27, 5
      %p120 = por %p118, %p119
      %p121 = scmp.ne.s32.totalorder %s110, %s111
      %p122 = scmp.eq.s32.totalorder %s27, 0
      %p123 = por %p121, %p122
      %p124 = scmp.ne.s32.totalorder %s110, %s111
      %p125 = scmp.eq.s32.totalorder %s28, 5
      %p126 = por %p124, %p125
      %p128 = scmp.ne.s32.totalorder %s111, %s127
      %p129 = scmp.eq.s32.totalorder %s28, 0
      %p130 = por %p128, %p129
      %s131 = ssub.s32 %s29, %s48
      %s132 = ssub.s32 %s30, %s44
      %s133 = sor.u32 %s131, %s132
      %p134 = scmp.eq.s32.totalorder %s133, 0
      %s136 = sadd.s32 %s135, 1
      %s137 = scalar_select %p134, %s135, %s136
      %p140 = pneg %p134
      %p141 = scmp.eq.s32.totalorder %s22, 5
      %p142 = por %p140, %p141
      %p143 = scmp.ne.s32.totalorder %s135, %s138
      %p144 = scmp.eq.s32.totalorder %s22, 0
      %p145 = por %p143, %p144
      %p146 = scmp.ne.s32.totalorder %s135, %s138
      %p147 = scmp.eq.s32.totalorder %s27, 5
      %p148 = por %p146, %p147
      %p149 = scmp.ne.s32.totalorder %s138, %s139
      %p150 = scmp.eq.s32.totalorder %s27, 0
      %p151 = por %p149, %p150
      %p152 = scmp.ne.s32.totalorder %s138, %s139
      %p153 = scmp.eq.s32.totalorder %s28, 5
      %p154 = por %p152, %p153
      %p156 = scmp.ne.s32.totalorder %s139, %s155
      %p157 = scmp.eq.s32.totalorder %s28, 0
      %p158 = por %p156, %p157
      %s159 = ssub.s32 %s29, %s48
      %s160 = ssub.s32 %s30, %s44
      %s161 = sor.u32 %s159, %s160
      %p162 = scmp.eq.s32.totalorder %s161, 0
      %s164 = sadd.s32 %s163, 1
      %s165 = scalar_select %p162, %s163, %s164
      %p168 = pneg %p162
      %p169 = scmp.eq.s32.totalorder %s22, 5
      %p170 = por %p168, %p169
      %p171 = scmp.ne.s32.totalorder %s163, %s166
      %p172 = scmp.eq.s32.totalorder %s22, 0
      %p173 = por %p171, %p172
      %p174 = scmp.ne.s32.totalorder %s163, %s166
      %p175 = scmp.eq.s32.totalorder %s27, 5
      %p176 = por %p174, %p175
      %p177 = scmp.ne.s32.totalorder %s166, %s167
      %p178 = scmp.eq.s32.totalorder %s27, 0
      %p179 = por %p177, %p178
      %p180 = scmp.ne.s32.totalorder %s166, %s167
      %p181 = scmp.eq.s32.totalorder %s28, 5
      %p182 = por %p180, %p181
      %p184 = scmp.ne.s32.totalorder %s167, %s183
      %p185 = scmp.eq.s32.totalorder %s28, 0
      %p186 = por %p184, %p185
      %p187 = scmp.le.s32.totalorder 1, %s22
      %p188 = scmp.lt.s32.totalorder %s22, 7
      %p189 = pnand %p187, %p188
      %p190 = pneg %p189
      // Predicated region
      $region9: #{tpu_custom_call.1} parent=5 // pred_check
        _
      $region10: #{tpu_custom_call.1} parent=5 // pred_check_branch
        %192 = sbr.rel (%p189) target = $region12
      $region11: #{tpu_custom_call.1} parent=5 // pred_region
        %s193 = ssub.s32 %s22, 1
        // Predicated region
        $region13: #{tpu_custom_call.1} parent=11 // pred_check
          %p194 = pneg %p123
        $region14: #{tpu_custom_call.1} parent=11 // pred_check_branch
          %196 = sbr.rel (%p194) target = $region16
        $region15: #{tpu_custom_call.1} parent=11 // pred_region
          %s197 = smul.u32 2, %s33
          %s199 = ssub.s32 32, 32
          %200 = vsyncadd [#allocation7], %s199
          %s201 = smul.addr %s197, 16
          %s202 = scalar_lea.hbm %s2, %s201
          %s204 = sshll.u32 [#allocation8], 4
          %s205 = int_to_ptr.vmem [resolvable:$true] %s204
          %207 = dma.hbm_to_vmem [thread:$0]  %s202, 32, %s205, [#allocation7]
        $region16: #{tpu_custom_call.1} parent=11 // pred_fallthru
          _
      $region12: #{tpu_custom_call.1} parent=5 // pred_fallthru
        _
      %p208 = scmp.lt.s32.totalorder %s22, 6
      // Predicated region
      $region17: #{tpu_custom_call.1} parent=5 // pred_check
        %p209 = pneg %p208
      $region18: #{tpu_custom_call.1} parent=5 // pred_check_branch
        %211 = sbr.rel (%p209) target = $region20
      $region19: #{tpu_custom_call.1} parent=5 // pred_region
        // Predicated region
        $region21: #{tpu_custom_call.1} parent=19 // pred_check
          %p212 = pneg %p63
        $region22: #{tpu_custom_call.1} parent=19 // pred_check_branch
          %214 = sbr.rel (%p212) target = $region24
        $region23: #{tpu_custom_call.1} parent=19 // pred_region
          %s215 = sand.u32 %s53, 1
          %s216 = scalar_lea.sflag [#allocation4], %s215
          %s217 = sand.u32 %s53, 1
          %s218 = smul.addr %s217, 384
          %s219 = scalar_lea.vmem [#allocation3], %s218
          %s220 = smul.u32 16, %s29
          %s221 = smul.u32 6, %s31
          %s223 = ssub.s32 6144, 6144
          %224 = vsyncadd %s216, %s223
          %s225 = smul.addr %s220, 18
          %s226 = sadd.s32 %s221, %s225
          %s227 = smul.addr %s226, 64
          %s228 = scalar_lea.hbm %s0, %s227
          %s229 = sshll.u32 %s219, 4
          %s230 = int_to_ptr.vmem [resolvable:$true] %s229
          %235 = dma.hbm_to_vmem [thread:$0]  %s228, 6144, %s230, %s216, 1152, 384, 24
        $region24: #{tpu_custom_call.1} parent=19 // pred_fallthru
          _
        // Predicated region
        $region25: #{tpu_custom_call.1} parent=19 // pred_check
          %p236 = pneg %p91
        $region26: #{tpu_custom_call.1} parent=19 // pred_check_branch
          %238 = sbr.rel (%p236) target = $region28
        $region27: #{tpu_custom_call.1} parent=19 // pred_region
          %s239 = sand.u32 %s22, 1
          %s240 = scalar_lea.sflag [#allocation7], %s239
          %s241 = sand.u32 %s81, 1
          %s242 = smul.addr %s241, 768
          %s243 = scalar_lea.vmem [#allocation6], %s242
          %s244 = smul.u32 96, %s31
          %s245 = smul.u32 2, %s30
          %s247 = ssub.s32 12288, 12288
          %248 = vsyncadd %s240, %s247
          %s249 = smul.addr %s244, 2
          %s250 = sadd.s32 %s245, %s249
          %s251 = smul.addr %s250, 64
          %s252 = scalar_lea.hbm %s1, %s251
          %s253 = sshll.u32 %s243, 4
          %s254 = int_to_ptr.vmem [resolvable:$true] %s253
          %259 = dma.hbm_to_vmem [thread:$0]  %s252, 12288, %s254, %s240, 128, 128, 8
        $region28: #{tpu_custom_call.1} parent=19 // pred_fallthru
          _
        // Predicated region
        $region29: #{tpu_custom_call.1} parent=19 // pred_check
          %p260 = pneg %p145
        $region30: #{tpu_custom_call.1} parent=19 // pred_check_branch
          %262 = sbr.rel (%p260) target = $region32
        $region31: #{tpu_custom_call.1} parent=19 // pred_region
          %s263 = sand.u32 %s135, 1
          %s264 = scalar_lea.sflag [#allocation10], %s263
          %s265 = sand.u32 %s135, 1
          %s266 = smul.addr %s265, 128
          %s267 = scalar_lea.vmem [#allocation9], %s266
          %s268 = smul.u32 16, %s29
          %s269 = smul.u32 2, %s30
          %s271 = ssub.s32 2048, 2048
          %272 = vsyncadd %s264, %s271
          %s273 = smul.addr %s268, 2
          %s274 = sadd.s32 %s269, %s273
          %s275 = smul.addr %s274, 64
          %s276 = scalar_lea.hbm %s3, %s275
          %s277 = sshll.u32 %s267, 4
          %s278 = int_to_ptr.vmem [resolvable:$true] %s277
          %283 = dma.hbm_to_vmem [thread:$0]  %s276, 2048, %s278, %s264, 128, 128, 8
        $region32: #{tpu_custom_call.1} parent=19 // pred_fallthru
          _
      $region20: #{tpu_custom_call.1} parent=5 // pred_fallthru
        _
      %p284 = scmp.le.s32.totalorder 1, %s22
      %p285 = scmp.lt.s32.totalorder %s22, 7
      %p286 = pnand %p284, %p285
      %p287 = pneg %p286
      // Predicated region
      $region33: #{tpu_custom_call.1} parent=5 // pred_check
        _
      $region34: #{tpu_custom_call.1} parent=5 // pred_check_branch
        %289 = sbr.rel (%p286) target = $region36
      $region35: #{tpu_custom_call.1} parent=5 // pred_region
        %s290 = ssub.s32 %s22, 1
        %s291 = sand.u32 %s56, 1
        %s292 = scalar_lea.sflag [#allocation4], %s291
        %s293 = sand.u32 %s56, 1
        %s294 = smul.addr %s293, 384
        %s295 = scalar_lea.vmem [#allocation3], %s294
        // Predicated region
        $region37: #{tpu_custom_call.1} parent=35 // pred_check
          %p296 = pneg %p69
        $region38: #{tpu_custom_call.1} parent=35 // pred_check_branch
          %298 = sbr.rel (%p296) target = $region40
        $region39: #{tpu_custom_call.1} parent=35 // pred_region
          %299 = dma.done %s292, 6144
        $region40: #{tpu_custom_call.1} parent=35 // pred_fallthru
          _
        %s300 = sand.u32 %s27, 1
        %s301 = scalar_lea.sflag [#allocation7], %s300
        %s302 = sand.u32 %s84, 1
        %s303 = smul.addr %s302, 768
        %s304 = scalar_lea.vmem [#allocation6], %s303
        // Predicated region
        $region41: #{tpu_custom_call.1} parent=35 // pred_check
          %p305 = pneg %p97
        $region42: #{tpu_custom_call.1} parent=35 // pred_check_branch
          %307 = sbr.rel (%p305) target = $region44
        $region43: #{tpu_custom_call.1} parent=35 // pred_region
          %308 = dma.done %s301, 12288
        $region44: #{tpu_custom_call.1} parent=35 // pred_fallthru
          _
        // Predicated region
        $region45: #{tpu_custom_call.1} parent=35 // pred_check
          %p309 = pneg %p123
        $region46: #{tpu_custom_call.1} parent=35 // pred_check_branch
          %311 = sbr.rel (%p309) target = $region48
        $region47: #{tpu_custom_call.1} parent=35 // pred_region
          %312 = dma.done [#allocation7], 32
        $region48: #{tpu_custom_call.1} parent=35 // pred_fallthru
          _
        %s313 = sand.u32 %s138, 1
        %s314 = scalar_lea.sflag [#allocation10], %s313
        %s315 = sand.u32 %s138, 1
        %s316 = smul.addr %s315, 128
        %s317 = scalar_lea.vmem [#allocation9], %s316
        // Predicated region
        $region49: #{tpu_custom_call.1} parent=35 // pred_check
          %p318 = pneg %p151
        $region50: #{tpu_custom_call.1} parent=35 // pred_check_branch
          %320 = sbr.rel (%p318) target = $region52
        $region51: #{tpu_custom_call.1} parent=35 // pred_region
          %321 = dma.done %s314, 2048
        $region52: #{tpu_custom_call.1} parent=35 // pred_fallthru
          _
        %s322 = sand.u32 %s56, 1
        %s323 = scalar_lea.sflag [#allocation4], %s322
        %s324 = sand.u32 %s56, 1
        %s325 = smul.addr %s324, 384
        %s326 = scalar_lea.vmem [#allocation3], %s325
        %p327 = pneg %p69
        %p328 = pneg %p66
        %s329 = sand.u32 %s27, 1
        %s330 = scalar_lea.sflag [#allocation7], %s329
        %s331 = sand.u32 %s84, 1
        %s332 = smul.addr %s331, 768
        %s333 = scalar_lea.vmem [#allocation6], %s332
        %p334 = pneg %p97
        %p335 = pneg %p94
        %p336 = pneg %p123
        %p337 = pneg %p120
        %s338 = sand.u32 %s138, 1
        %s339 = scalar_lea.sflag [#allocation10], %s338
        %s340 = sand.u32 %s138, 1
        %s341 = smul.addr %s340, 128
        %s342 = scalar_lea.vmem [#allocation9], %s341
        %p343 = pneg %p151
        %p344 = pneg %p148
        %p345 = pneg %p179
        %p346 = pneg %p176
        %s347 = sand.u32 %s166, 1
        %s348 = scalar_lea.sflag [#allocation5], %s347
        %s349 = sand.u32 %s166, 1
        %s350 = smul.addr %s349, 128
        %s351 = scalar_lea.vmem [#allocation11], %s350
        %s352 = smul.u32 16, %s32
        %s353 = smul.u32 6, %s34
        %s354 = smul.u32 96, %s34
        %s355 = smul.u32 2, %s33
        %s356 = smul.u32 2, %s33
        %s357 = smul.u32 16, %s32
        %s358 = smul.u32 2, %s33
        %s359 = smul.u32 16, %s32
        %s360 = smul.u32 2, %s33
        %p361 = scmp.eq.s32.totalorder %s34, 0
        // Predicated region
        $region53: #{tpu_custom_call.1} parent=35 // pred_check
          %p362 = pneg %p361
        $region54: #{tpu_custom_call.1} parent=35 // pred_check_branch
          %364 = sbr.rel (%p362) target = $region56
        $region55: #{tpu_custom_call.1} parent=35 // pred_region
          %365 = vst [vmem:[#allocation2] sm:$0xff] 0.0
          %366 = vst [vmem:[#allocation2 + $0x8] sm:$0xff] 0.0
          %367 = vst [vmem:[#allocation2 + $0x10] sm:$0xff] 0.0
          %368 = vst [vmem:[#allocation2 + $0x18] sm:$0xff] 0.0
          %369 = vst [vmem:[#allocation2 + $0x20] sm:$0xff] 0.0
          %370 = vst [vmem:[#allocation2 + $0x28] sm:$0xff] 0.0
          %371 = vst [vmem:[#allocation2 + $0x30] sm:$0xff] 0.0
          %372 = vst [vmem:[#allocation2 + $0x38] sm:$0xff] 0.0
          %373 = vst [vmem:[#allocation2 + $0x40] sm:$0xff] 0.0
          %374 = vst [vmem:[#allocation2 + $0x48] sm:$0xff] 0.0
          %375 = vst [vmem:[#allocation2 + $0x50] sm:$0xff] 0.0
          %376 = vst [vmem:[#allocation2 + $0x58] sm:$0xff] 0.0
          %377 = vst [vmem:[#allocation2 + $0x60] sm:$0xff] 0.0
          %378 = vst [vmem:[#allocation2 + $0x68] sm:$0xff] 0.0
          %379 = vst [vmem:[#allocation2 + $0x70] sm:$0xff] 0.0
          %380 = vst [vmem:[#allocation2 + $0x78] sm:$0xff] 0.0
          %381 = vst [vmem:[#allocation2 + $0x80] sm:$0xff] 0.0
          %382 = vst [vmem:[#allocation2 + $0x88] sm:$0xff] 0.0
          %383 = vst [vmem:[#allocation2 + $0x90] sm:$0xff] 0.0
          %384 = vst [vmem:[#allocation2 + $0x98] sm:$0xff] 0.0
          %385 = vst [vmem:[#allocation2 + $0xa0] sm:$0xff] 0.0
          %386 = vst [vmem:[#allocation2 + $0xa8] sm:$0xff] 0.0
          %387 = vst [vmem:[#allocation2 + $0xb0] sm:$0xff] 0.0
          %388 = vst [vmem:[#allocation2 + $0xb8] sm:$0xff] 0.0
          %389 = vst [vmem:[#allocation2 + $0xc0] sm:$0xff] 0.0
          %390 = vst [vmem:[#allocation2 + $0xc8] sm:$0xff] 0.0
          %391 = vst [vmem:[#allocation2 + $0xd0] sm:$0xff] 0.0
          %392 = vst [vmem:[#allocation2 + $0xd8] sm:$0xff] 0.0
          %393 = vst [vmem:[#allocation2 + $0xe0] sm:$0xff] 0.0
          %394 = vst [vmem:[#allocation2 + $0xe8] sm:$0xff] 0.0
          %395 = vst [vmem:[#allocation2 + $0xf0] sm:$0xff] 0.0
          %396 = vst [vmem:[#allocation2 + $0xf8] sm:$0xff] 0.0
        $region56: #{tpu_custom_call.1} parent=35 // pred_fallthru
          _
        %v397 = vld [vmem:[#allocation2] sm:$0xff]
        %v398 = vld [vmem:[#allocation2 + $0x8] sm:$0xff]
        %v399 = vld [vmem:[#allocation2 + $0x10] sm:$0xff]
        %v400 = vld [vmem:[#allocation2 + $0x18] sm:$0xff]
        %v401 = vld [vmem:[#allocation2 + $0x20] sm:$0xff]
        %v402 = vld [vmem:[#allocation2 + $0x28] sm:$0xff]
        %v403 = vld [vmem:[#allocation2 + $0x30] sm:$0xff]
        %v404 = vld [vmem:[#allocation2 + $0x38] sm:$0xff]
        %v405 = vld [vmem:[#allocation2 + $0x40] sm:$0xff]
        %v406 = vld [vmem:[#allocation2 + $0x48] sm:$0xff]
        %v407 = vld [vmem:[#allocation2 + $0x50] sm:$0xff]
        %v408 = vld [vmem:[#allocation2 + $0x58] sm:$0xff]
        %v409 = vld [vmem:[#allocation2 + $0x60] sm:$0xff]
        %v410 = vld [vmem:[#allocation2 + $0x68] sm:$0xff]
        %v411 = vld [vmem:[#allocation2 + $0x70] sm:$0xff]
        %v412 = vld [vmem:[#allocation2 + $0x78] sm:$0xff]
        %v413 = vld [vmem:[#allocation2 + $0x80] sm:$0xff]
        %v414 = vld [vmem:[#allocation2 + $0x88] sm:$0xff]
        %v415 = vld [vmem:[#allocation2 + $0x90] sm:$0xff]
        %v416 = vld [vmem:[#allocation2 + $0x98] sm:$0xff]
        %v417 = vld [vmem:[#allocation2 + $0xa0] sm:$0xff]
        %v418 = vld [vmem:[#allocation2 + $0xa8] sm:$0xff]
        %v419 = vld [vmem:[#allocation2 + $0xb0] sm:$0xff]
        %v420 = vld [vmem:[#allocation2 + $0xb8] sm:$0xff]
        %v421 = vld [vmem:[#allocation2 + $0xc0] sm:$0xff]
        %v422 = vld [vmem:[#allocation2 + $0xc8] sm:$0xff]
        %v423 = vld [vmem:[#allocation2 + $0xd0] sm:$0xff]
        %v424 = vld [vmem:[#allocation2 + $0xd8] sm:$0xff]
        %v425 = vld [vmem:[#allocation2 + $0xe0] sm:$0xff]
        %v426 = vld [vmem:[#allocation2 + $0xe8] sm:$0xff]
        %v427 = vld [vmem:[#allocation2 + $0xf0] sm:$0xff]
        %v428 = vld [vmem:[#allocation2 + $0xf8] sm:$0xff]
        %v429 = vld [vmem:[%s295] sm:$0xff]
        %v430 = vld [vmem:[%s295 + $0x8] sm:$0xff]
        %v431 = vld [vmem:[%s295 + $0x10] sm:$0xff]
        %v432 = vld [vmem:[%s295 + $0x18] sm:$0xff]
        %v433 = vld [vmem:[%s295 + $0x20] sm:$0xff]
        %v434 = vld [vmem:[%s295 + $0x28] sm:$0xff]
        %v435 = vld [vmem:[%s295 + $0x30] sm:$0xff]
        %v436 = vld [vmem:[%s295 + $0x38] sm:$0xff]
        %v437 = vld [vmem:[%s295 + $0x40] sm:$0xff]
        %v438 = vld [vmem:[%s295 + $0x48] sm:$0xff]
        %v439 = vld [vmem:[%s295 + $0x50] sm:$0xff]
        %v440 = vld [vmem:[%s295 + $0x58] sm:$0xff]
        %v441 = vld [vmem:[%s295 + $0x60] sm:$0xff]
        %v442 = vld [vmem:[%s295 + $0x68] sm:$0xff]
        %v443 = vld [vmem:[%s295 + $0x70] sm:$0xff]
        %v444 = vld [vmem:[%s295 + $0x78] sm:$0xff]
        %v445 = vld [vmem:[%s295 + $0x80] sm:$0xff]
        %v446 = vld [vmem:[%s295 + $0x88] sm:$0xff]
        %v447 = vld [vmem:[%s295 + $0x90] sm:$0xff]
        %v448 = vld [vmem:[%s295 + $0x98] sm:$0xff]
        %v449 = vld [vmem:[%s295 + $0xa0] sm:$0xff]
        %v450 = vld [vmem:[%s295 + $0xa8] sm:$0xff]
        %v451 = vld [vmem:[%s295 + $0xb0] sm:$0xff]
        %v452 = vld [vmem:[%s295 + $0xb8] sm:$0xff]
        %v453 = vld [vmem:[%s295 + $0xc0] sm:$0xff]
        %v454 = vld [vmem:[%s295 + $0xc8] sm:$0xff]
        %v455 = vld [vmem:[%s295 + $0xd0] sm:$0xff]
        %v456 = vld [vmem:[%s295 + $0xd8] sm:$0xff]
        %v457 = vld [vmem:[%s295 + $0xe0] sm:$0xff]
        %v458 = vld [vmem:[%s295 + $0xe8] sm:$0xff]
        %v459 = vld [vmem:[%s295 + $0xf0] sm:$0xff]
        %v460 = vld [vmem:[%s295 + $0xf8] sm:$0xff]
        %v461 = vld [vmem:[%s295 + $0x100] sm:$0xff]
        %v462 = vld [vmem:[%s295 + $0x108] sm:$0xff]
        %v463 = vld [vmem:[%s295 + $0x110] sm:$0xff]
        %v464 = vld [vmem:[%s295 + $0x118] sm:$0xff]
        %v465 = vld [vmem:[%s295 + $0x120] sm:$0xff]
        %v466 = vld [vmem:[%s295 + $0x128] sm:$0xff]
        %v467 = vld [vmem:[%s295 + $0x130] sm:$0xff]
        %v468 = vld [vmem:[%s295 + $0x138] sm:$0xff]
        %v469 = vld [vmem:[%s295 + $0x140] sm:$0xff]
        %v470 = vld [vmem:[%s295 + $0x148] sm:$0xff]
        %v471 = vld [vmem:[%s295 + $0x150] sm:$0xff]
        %v472 = vld [vmem:[%s295 + $0x158] sm:$0xff]
        %v473 = vld [vmem:[%s295 + $0x160] sm:$0xff]
        %v474 = vld [vmem:[%s295 + $0x168] sm:$0xff]
        %v475 = vld [vmem:[%s295 + $0x170] sm:$0xff]
        %v476 = vld [vmem:[%s295 + $0x178] sm:$0xff]
        %v477 = vld [vmem:[%s304] sm:$0xff]
        %v478 = vld [vmem:[%s304 + $0x8] sm:$0xff]
        %v479 = vld [vmem:[%s304 + $0x10] sm:$0xff]
        %v480 = vld [vmem:[%s304 + $0x18] sm:$0xff]
        %v481 = vld [vmem:[%s304 + $0x20] sm:$0xff]
        %v482 = vld [vmem:[%s304 + $0x28] sm:$0xff]
        %v483 = vld [vmem:[%s304 + $0x30] sm:$0xff]
        %v484 = vld [vmem:[%s304 + $0x38] sm:$0xff]
        %v485 = vld [vmem:[%s304 + $0x40] sm:$0xff]
        %v486 = vld [vmem:[%s304 + $0x48] sm:$0xff]
        %v487 = vld [vmem:[%s304 + $0x50] sm:$0xff]
        %v488 = vld [vmem:[%s304 + $0x58] sm:$0xff]
        %v489 = vld [vmem:[%s304 + $0x60] sm:$0xff]
        %v490 = vld [vmem:[%s304 + $0x68] sm:$0xff]
        %v491 = vld [vmem:[%s304 + $0x70] sm:$0xff]
        %v492 = vld [vmem:[%s304 + $0x78] sm:$0xff]
        %v493 = vld [vmem:[%s304 + $0x80] sm:$0xff]
        %v494 = vld [vmem:[%s304 + $0x88] sm:$0xff]
        %v495 = vld [vmem:[%s304 + $0x90] sm:$0xff]
        %v496 = vld [vmem:[%s304 + $0x98] sm:$0xff]
        %v497 = vld [vmem:[%s304 + $0xa0] sm:$0xff]
        %v498 = vld [vmem:[%s304 + $0xa8] sm:$0xff]
        %v499 = vld [vmem:[%s304 + $0xb0] sm:$0xff]
        %v500 = vld [vmem:[%s304 + $0xb8] sm:$0xff]
        %v501 = vld [vmem:[%s304 + $0xc0] sm:$0xff]
        %v502 = vld [vmem:[%s304 + $0xc8] sm:$0xff]
        %v503 = vld [vmem:[%s304 + $0xd0] sm:$0xff]
        %v504 = vld [vmem:[%s304 + $0xd8] sm:$0xff]
        %v505 = vld [vmem:[%s304 + $0xe0] sm:$0xff]
        %v506 = vld [vmem:[%s304 + $0xe8] sm:$0xff]
        %v507 = vld [vmem:[%s304 + $0xf0] sm:$0xff]
        %v508 = vld [vmem:[%s304 + $0xf8] sm:$0xff]
        %v509 = vld [vmem:[%s304 + $0x100] sm:$0xff]
        %v510 = vld [vmem:[%s304 + $0x108] sm:$0xff]
        %v511 = vld [vmem:[%s304 + $0x110] sm:$0xff]
        %v512 = vld [vmem:[%s304 + $0x118] sm:$0xff]
        %v513 = vld [vmem:[%s304 + $0x120] sm:$0xff]
        %v514 = vld [vmem:[%s304 + $0x128] sm:$0xff]
        %v515 = vld [vmem:[%s304 + $0x130] sm:$0xff]
        %v516 = vld [vmem:[%s304 + $0x138] sm:$0xff]
        %v517 = vld [vmem:[%s304 + $0x140] sm:$0xff]
        %v518 = vld [vmem:[%s304 + $0x148] sm:$0xff]
        %v519 = vld [vmem:[%s304 + $0x150] sm:$0xff]
        %v520 = vld [vmem:[%s304 + $0x158] sm:$0xff]
        %v521 = vld [vmem:[%s304 + $0x160] sm:$0xff]
        %v522 = vld [vmem:[%s304 + $0x168] sm:$0xff]
        %v523 = vld [vmem:[%s304 + $0x170] sm:$0xff]
        %v524 = vld [vmem:[%s304 + $0x178] sm:$0xff]
        %v525 = vld [vmem:[%s304 + $0x180] sm:$0xff]
        %v526 = vld [vmem:[%s304 + $0x188] sm:$0xff]
        %v527 = vld [vmem:[%s304 + $0x190] sm:$0xff]
        %v528 = vld [vmem:[%s304 + $0x198] sm:$0xff]
        %v529 = vld [vmem:[%s304 + $0x1a0] sm:$0xff]
        %v530 = vld [vmem:[%s304 + $0x1a8] sm:$0xff]
        %v531 = vld [vmem:[%s304 + $0x1b0] sm:$0xff]
        %v532 = vld [vmem:[%s304 + $0x1b8] sm:$0xff]
        %v533 = vld [vmem:[%s304 + $0x1c0] sm:$0xff]
        %v534 = vld [vmem:[%s304 + $0x1c8] sm:$0xff]
        %v535 = vld [vmem:[%s304 + $0x1d0] sm:$0xff]
        %v536 = vld [vmem:[%s304 + $0x1d8] sm:$0xff]
        %v537 = vld [vmem:[%s304 + $0x1e0] sm:$0xff]
        %v538 = vld [vmem:[%s304 + $0x1e8] sm:$0xff]
        %v539 = vld [vmem:[%s304 + $0x1f0] sm:$0xff]
        %v540 = vld [vmem:[%s304 + $0x1f8] sm:$0xff]
        %v541 = vld [vmem:[%s304 + $0x200] sm:$0xff]
        %v542 = vld [vmem:[%s304 + $0x208] sm:$0xff]
        %v543 = vld [vmem:[%s304 + $0x210] sm:$0xff]
        %v544 = vld [vmem:[%s304 + $0x218] sm:$0xff]
        %v545 = vld [vmem:[%s304 + $0x220] sm:$0xff]
        %v546 = vld [vmem:[%s304 + $0x228] sm:$0xff]
        %v547 = vld [vmem:[%s304 + $0x230] sm:$0xff]
        %v548 = vld [vmem:[%s304 + $0x238] sm:$0xff]
        %v549 = vld [vmem:[%s304 + $0x240] sm:$0xff]
        %v550 = vld [vmem:[%s304 + $0x248] sm:$0xff]
        %v551 = vld [vmem:[%s304 + $0x250] sm:$0xff]
        %v552 = vld [vmem:[%s304 + $0x258] sm:$0xff]
        %v553 = vld [vmem:[%s304 + $0x260] sm:$0xff]
        %v554 = vld [vmem:[%s304 + $0x268] sm:$0xff]
        %v555 = vld [vmem:[%s304 + $0x270] sm:$0xff]
        %v556 = vld [vmem:[%s304 + $0x278] sm:$0xff]
        %v557 = vld [vmem:[%s304 + $0x280] sm:$0xff]
        %v558 = vld [vmem:[%s304 + $0x288] sm:$0xff]
        %v559 = vld [vmem:[%s304 + $0x290] sm:$0xff]
        %v560 = vld [vmem:[%s304 + $0x298] sm:$0xff]
        %v561 = vld [vmem:[%s304 + $0x2a0] sm:$0xff]
        %v562 = vld [vmem:[%s304 + $0x2a8] sm:$0xff]
        %v563 = vld [vmem:[%s304 + $0x2b0] sm:$0xff]
        %v564 = vld [vmem:[%s304 + $0x2b8] sm:$0xff]
        %v565 = vld [vmem:[%s304 + $0x2c0] sm:$0xff]
        %v566 = vld [vmem:[%s304 + $0x2c8] sm:$0xff]
        %v567 = vld [vmem:[%s304 + $0x2d0] sm:$0xff]
        %v568 = vld [vmem:[%s304 + $0x2d8] sm:$0xff]
        %v569 = vld [vmem:[%s304 + $0x2e0] sm:$0xff]
        %v570 = vld [vmem:[%s304 + $0x2e8] sm:$0xff]
        %v571 = vld [vmem:[%s304 + $0x2f0] sm:$0xff]
        %v572 = vld [vmem:[%s304 + $0x2f8] sm:$0xff]
        %v621 = vunpack.c.l.b16 %v429
        %v622 = vunpack.c.h.b16 %v429
        %v623 = vunpack.c.l.b16 %v430
        %v624 = vunpack.c.h.b16 %v430
        %v625 = vunpack.c.l.b16 %v431
        %v626 = vunpack.c.h.b16 %v431
        %v627 = vunpack.c.l.b16 %v432
        %v628 = vunpack.c.h.b16 %v432
        %v629 = vunpack.c.l.b16 %v433
        %v630 = vunpack.c.h.b16 %v433
        %v631 = vunpack.c.l.b16 %v434
        %v632 = vunpack.c.h.b16 %v434
        %v633 = vunpack.c.l.b16 %v435
        %v634 = vunpack.c.h.b16 %v435
        %v635 = vunpack.c.l.b16 %v436
        %v636 = vunpack.c.h.b16 %v436
        %v637 = vunpack.c.l.b16 %v437
        %v638 = vunpack.c.h.b16 %v437
        %v639 = vunpack.c.l.b16 %v438
        %v640 = vunpack.c.h.b16 %v438
        %v641 = vunpack.c.l.b16 %v439
        %v642 = vunpack.c.h.b16 %v439
        %v643 = vunpack.c.l.b16 %v440
        %v644 = vunpack.c.h.b16 %v440
        %v645 = vunpack.c.l.b16 %v441
        %v646 = vunpack.c.h.b16 %v441
        %v647 = vunpack.c.l.b16 %v442
        %v648 = vunpack.c.h.b16 %v442
        %v649 = vunpack.c.l.b16 %v443
        %v650 = vunpack.c.h.b16 %v443
        %v651 = vunpack.c.l.b16 %v444
        %v652 = vunpack.c.h.b16 %v444
        %v653 = vunpack.c.l.b16 %v445
        %v654 = vunpack.c.h.b16 %v445
        %v655 = vunpack.c.l.b16 %v446
        %v656 = vunpack.c.h.b16 %v446
        %v657 = vunpack.c.l.b16 %v447
        %v658 = vunpack.c.h.b16 %v447
        %v659 = vunpack.c.l.b16 %v448
        %v660 = vunpack.c.h.b16 %v448
        %v661 = vunpack.c.l.b16 %v449
        %v662 = vunpack.c.h.b16 %v449
        %v663 = vunpack.c.l.b16 %v450
        %v664 = vunpack.c.h.b16 %v450
        %v665 = vunpack.c.l.b16 %v451
        %v666 = vunpack.c.h.b16 %v451
        %v667 = vunpack.c.l.b16 %v452
        %v668 = vunpack.c.h.b16 %v452
        %v669 = vunpack.c.l.b16 %v453
        %v670 = vunpack.c.h.b16 %v453
        %v671 = vunpack.c.l.b16 %v454
        %v672 = vunpack.c.h.b16 %v454
        %v673 = vunpack.c.l.b16 %v455
        %v674 = vunpack.c.h.b16 %v455
        %v675 = vunpack.c.l.b16 %v456
        %v676 = vunpack.c.h.b16 %v456
        %v677 = vunpack.c.l.b16 %v457
        %v678 = vunpack.c.h.b16 %v457
        %v679 = vunpack.c.l.b16 %v458
        %v680 = vunpack.c.h.b16 %v458
        %v681 = vunpack.c.l.b16 %v459
        %v682 = vunpack.c.h.b16 %v459
        %v683 = vunpack.c.l.b16 %v460
        %v684 = vunpack.c.h.b16 %v460
        %v685 = vunpack.c.l.b16 %v461
        %v686 = vunpack.c.h.b16 %v461
        %v687 = vunpack.c.l.b16 %v462
        %v688 = vunpack.c.h.b16 %v462
        %v689 = vunpack.c.l.b16 %v463
        %v690 = vunpack.c.h.b16 %v463
        %v691 = vunpack.c.l.b16 %v464
        %v692 = vunpack.c.h.b16 %v464
        %v693 = vunpack.c.l.b16 %v465
        %v694 = vunpack.c.h.b16 %v465
        %v695 = vunpack.c.l.b16 %v466
        %v696 = vunpack.c.h.b16 %v466
        %v697 = vunpack.c.l.b16 %v467
        %v698 = vunpack.c.h.b16 %v467
        %v699 = vunpack.c.l.b16 %v468
        %v700 = vunpack.c.h.b16 %v468
        %v701 = vunpack.c.l.b16 %v469
        %v702 = vunpack.c.h.b16 %v469
        %v703 = vunpack.c.l.b16 %v470
        %v704 = vunpack.c.h.b16 %v470
        %v705 = vunpack.c.l.b16 %v471
        %v706 = vunpack.c.h.b16 %v471
        %v707 = vunpack.c.l.b16 %v472
        %v708 = vunpack.c.h.b16 %v472
        %v709 = vunpack.c.l.b16 %v473
        %v710 = vunpack.c.h.b16 %v473
        %v711 = vunpack.c.l.b16 %v474
        %v712 = vunpack.c.h.b16 %v474
        %v713 = vunpack.c.l.b16 %v475
        %v714 = vunpack.c.h.b16 %v475
        %v715 = vunpack.c.l.b16 %v476
        %v716 = vunpack.c.h.b16 %v476
        %v717 = vpack.c.b16 %v627, %v621
        %v718 = vpack.c.b16 %v628, %v622
        %v719 = vpack.c.b16 %v629, %v623
        %v720 = vpack.c.b16 %v630, %v624
        %v721 = vpack.c.b16 %v631, %v625
        %v722 = vpack.c.b16 %v632, %v626
        %v723 = vpack.c.b16 %v639, %v633
        %v724 = vpack.c.b16 %v640, %v634
        %v725 = vpack.c.b16 %v641, %v635
        %v726 = vpack.c.b16 %v642, %v636
        %v727 = vpack.c.b16 %v643, %v637
        %v728 = vpack.c.b16 %v644, %v638
        %v729 = vpack.c.b16 %v651, %v645
        %v730 = vpack.c.b16 %v652, %v646
        %v731 = vpack.c.b16 %v653, %v647
        %v732 = vpack.c.b16 %v654, %v648
        %v733 = vpack.c.b16 %v655, %v649
        %v734 = vpack.c.b16 %v656, %v650
        %v735 = vpack.c.b16 %v663, %v657
        %v736 = vpack.c.b16 %v664, %v658
        %v737 = vpack.c.b16 %v665, %v659
        %v738 = vpack.c.b16 %v666, %v660
        %v739 = vpack.c.b16 %v667, %v661
        %v740 = vpack.c.b16 %v668, %v662
        %v741 = vpack.c.b16 %v675, %v669
        %v742 = vpack.c.b16 %v676, %v670
        %v743 = vpack.c.b16 %v677, %v671
        %v744 = vpack.c.b16 %v678, %v672
        %v745 = vpack.c.b16 %v679, %v673
        %v746 = vpack.c.b16 %v680, %v674
        %v747 = vpack.c.b16 %v687, %v681
        %v748 = vpack.c.b16 %v688, %v682
        %v749 = vpack.c.b16 %v689, %v683
        %v750 = vpack.c.b16 %v690, %v684
        %v751 = vpack.c.b16 %v691, %v685
        %v752 = vpack.c.b16 %v692, %v686
        %v753 = vpack.c.b16 %v699, %v693
        %v754 = vpack.c.b16 %v700, %v694
        %v755 = vpack.c.b16 %v701, %v695
        %v756 = vpack.c.b16 %v702, %v696
        %v757 = vpack.c.b16 %v703, %v697
        %v758 = vpack.c.b16 %v704, %v698
        %v759 = vpack.c.b16 %v711, %v705
        %v760 = vpack.c.b16 %v712, %v706
        %v761 = vpack.c.b16 %v713, %v707
        %v762 = vpack.c.b16 %v714, %v708
        %v763 = vpack.c.b16 %v715, %v709
        %v764 = vpack.c.b16 %v716, %v710
        %v909 = vunpack.c.l.b16 %v477
        %v910 = vunpack.c.h.b16 %v477
        %v911 = vunpack.c.l.b16 %v478
        %v912 = vunpack.c.h.b16 %v478
        %v913 = vunpack.c.l.b16 %v479
        %v914 = vunpack.c.h.b16 %v479
        %v915 = vunpack.c.l.b16 %v480
        %v916 = vunpack.c.h.b16 %v480
        %v917 = vunpack.c.l.b16 %v481
        %v918 = vunpack.c.h.b16 %v481
        %v919 = vunpack.c.l.b16 %v482
        %v920 = vunpack.c.h.b16 %v482
        %v921 = vunpack.c.l.b16 %v483
        %v922 = vunpack.c.h.b16 %v483
        %v923 = vunpack.c.l.b16 %v484
        %v924 = vunpack.c.h.b16 %v484
        %v925 = vunpack.c.l.b16 %v485
        %v926 = vunpack.c.h.b16 %v485
        %v927 = vunpack.c.l.b16 %v486
        %v928 = vunpack.c.h.b16 %v486
        %v929 = vunpack.c.l.b16 %v487
        %v930 = vunpack.c.h.b16 %v487
        %v931 = vunpack.c.l.b16 %v488
        %v932 = vunpack.c.h.b16 %v488
        %v933 = vunpack.c.l.b16 %v489
        %v934 = vunpack.c.h.b16 %v489
        %v935 = vunpack.c.l.b16 %v490
        %v936 = vunpack.c.h.b16 %v490
        %v937 = vunpack.c.l.b16 %v491
        %v938 = vunpack.c.h.b16 %v491
        %v939 = vunpack.c.l.b16 %v492
        %v940 = vunpack.c.h.b16 %v492
        %v941 = vunpack.c.l.b16 %v493
        %v942 = vunpack.c.h.b16 %v493
        %v943 = vunpack.c.l.b16 %v494
        %v944 = vunpack.c.h.b16 %v494
        %v945 = vunpack.c.l.b16 %v495
        %v946 = vunpack.c.h.b16 %v495
        %v947 = vunpack.c.l.b16 %v496
        %v948 = vunpack.c.h.b16 %v496
        %v949 = vunpack.c.l.b16 %v497
        %v950 = vunpack.c.h.b16 %v497
        %v951 = vunpack.c.l.b16 %v498
        %v952 = vunpack.c.h.b16 %v498
        %v953 = vunpack.c.l.b16 %v499
        %v954 = vunpack.c.h.b16 %v499
        %v955 = vunpack.c.l.b16 %v500
        %v956 = vunpack.c.h.b16 %v500
        %v957 = vunpack.c.l.b16 %v501
        %v958 = vunpack.c.h.b16 %v501
        %v959 = vunpack.c.l.b16 %v502
        %v960 = vunpack.c.h.b16 %v502
        %v961 = vunpack.c.l.b16 %v503
        %v962 = vunpack.c.h.b16 %v503
        %v963 = vunpack.c.l.b16 %v504
        %v964 = vunpack.c.h.b16 %v504
        %v965 = vunpack.c.l.b16 %v505
        %v966 = vunpack.c.h.b16 %v505
        %v967 = vunpack.c.l.b16 %v506
        %v968 = vunpack.c.h.b16 %v506
        %v969 = vunpack.c.l.b16 %v507
        %v970 = vunpack.c.h.b16 %v507
        %v971 = vunpack.c.l.b16 %v508
        %v972 = vunpack.c.h.b16 %v508
        %v973 = vunpack.c.l.b16 %v509
        %v974 = vunpack.c.h.b16 %v509
        %v975 = vunpack.c.l.b16 %v510
        %v976 = vunpack.c.h.b16 %v510
        %v977 = vunpack.c.l.b16 %v511
        %v978 = vunpack.c.h.b16 %v511
        %v979 = vunpack.c.l.b16 %v512
        %v980 = vunpack.c.h.b16 %v512
        %v981 = vunpack.c.l.b16 %v513
        %v982 = vunpack.c.h.b16 %v513
        %v983 = vunpack.c.l.b16 %v514
        %v984 = vunpack.c.h.b16 %v514
        %v985 = vunpack.c.l.b16 %v515
        %v986 = vunpack.c.h.b16 %v515
        %v987 = vunpack.c.l.b16 %v516
        %v988 = vunpack.c.h.b16 %v516
        %v989 = vunpack.c.l.b16 %v517
        %v990 = vunpack.c.h.b16 %v517
        %v991 = vunpack.c.l.b16 %v518
        %v992 = vunpack.c.h.b16 %v518
        %v993 = vunpack.c.l.b16 %v519
        %v994 = vunpack.c.h.b16 %v519
        %v995 = vunpack.c.l.b16 %v520
        %v996 = vunpack.c.h.b16 %v520
        %v997 = vunpack.c.l.b16 %v521
        %v998 = vunpack.c.h.b16 %v521
        %v999 = vunpack.c.l.b16 %v522
        %v1000 = vunpack.c.h.b16 %v522
        %v1001 = vunpack.c.l.b16 %v523
        %v1002 = vunpack.c.h.b16 %v523
        %v1003 = vunpack.c.l.b16 %v524
        %v1004 = vunpack.c.h.b16 %v524
        %v1005 = vunpack.c.l.b16 %v525
        %v1006 = vunpack.c.h.b16 %v525
        %v1007 = vunpack.c.l.b16 %v526
        %v1008 = vunpack.c.h.b16 %v526
        %v1009 = vunpack.c.l.b16 %v527
        %v1010 = vunpack.c.h.b16 %v527
        %v1011 = vunpack.c.l.b16 %v528
        %v1012 = vunpack.c.h.b16 %v528
        %v1013 = vunpack.c.l.b16 %v529
        %v1014 = vunpack.c.h.b16 %v529
        %v1015 = vunpack.c.l.b16 %v530
        %v1016 = vunpack.c.h.b16 %v530
        %v1017 = vunpack.c.l.b16 %v531
        %v1018 = vunpack.c.h.b16 %v531
        %v1019 = vunpack.c.l.b16 %v532
        %v1020 = vunpack.c.h.b16 %v532
        %v1021 = vunpack.c.l.b16 %v533
        %v1022 = vunpack.c.h.b16 %v533
        %v1023 = vunpack.c.l.b16 %v534
        %v1024 = vunpack.c.h.b16 %v534
        %v1025 = vunpack.c.l.b16 %v535
        %v1026 = vunpack.c.h.b16 %v535
        %v1027 = vunpack.c.l.b16 %v536
        %v1028 = vunpack.c.h.b16 %v536
        %v1029 = vunpack.c.l.b16 %v537
        %v1030 = vunpack.c.h.b16 %v537
        %v1031 = vunpack.c.l.b16 %v538
        %v1032 = vunpack.c.h.b16 %v538
        %v1033 = vunpack.c.l.b16 %v539
        %v1034 = vunpack.c.h.b16 %v539
        %v1035 = vunpack.c.l.b16 %v540
        %v1036 = vunpack.c.h.b16 %v540
        %v1037 = vunpack.c.l.b16 %v541
        %v1038 = vunpack.c.h.b16 %v541
        %v1039 = vunpack.c.l.b16 %v542
        %v1040 = vunpack.c.h.b16 %v542
        %v1041 = vunpack.c.l.b16 %v543
        %v1042 = vunpack.c.h.b16 %v543
        %v1043 = vunpack.c.l.b16 %v544
        %v1044 = vunpack.c.h.b16 %v544
        %v1045 = vunpack.c.l.b16 %v545
        %v1046 = vunpack.c.h.b16 %v545
        %v1047 = vunpack.c.l.b16 %v546
        %v1048 = vunpack.c.h.b16 %v546
        %v1049 = vunpack.c.l.b16 %v547
        %v1050 = vunpack.c.h.b16 %v547
        %v1051 = vunpack.c.l.b16 %v548
        %v1052 = vunpack.c.h.b16 %v548
        %v1053 = vunpack.c.l.b16 %v549
        %v1054 = vunpack.c.h.b16 %v549
        %v1055 = vunpack.c.l.b16 %v550
        %v1056 = vunpack.c.h.b16 %v550
        %v1057 = vunpack.c.l.b16 %v551
        %v1058 = vunpack.c.h.b16 %v551
        %v1059 = vunpack.c.l.b16 %v552
        %v1060 = vunpack.c.h.b16 %v552
        %v1061 = vunpack.c.l.b16 %v553
        %v1062 = vunpack.c.h.b16 %v553
        %v1063 = vunpack.c.l.b16 %v554
        %v1064 = vunpack.c.h.b16 %v554
        %v1065 = vunpack.c.l.b16 %v555
        %v1066 = vunpack.c.h.b16 %v555
        %v1067 = vunpack.c.l.b16 %v556
        %v1068 = vunpack.c.h.b16 %v556
        %v1069 = vunpack.c.l.b16 %v557
        %v1070 = vunpack.c.h.b16 %v557
        %v1071 = vunpack.c.l.b16 %v558
        %v1072 = vunpack.c.h.b16 %v558
        %v1073 = vunpack.c.l.b16 %v559
        %v1074 = vunpack.c.h.b16 %v559
        %v1075 = vunpack.c.l.b16 %v560
        %v1076 = vunpack.c.h.b16 %v560
        %v1077 = vunpack.c.l.b16 %v561
        %v1078 = vunpack.c.h.b16 %v561
        %v1079 = vunpack.c.l.b16 %v562
        %v1080 = vunpack.c.h.b16 %v562
        %v1081 = vunpack.c.l.b16 %v563
        %v1082 = vunpack.c.h.b16 %v563
        %v1083 = vunpack.c.l.b16 %v564
        %v1084 = vunpack.c.h.b16 %v564
        %v1085 = vunpack.c.l.b16 %v565
        %v1086 = vunpack.c.h.b16 %v565
        %v1087 = vunpack.c.l.b16 %v566
        %v1088 = vunpack.c.h.b16 %v566
        %v1089 = vunpack.c.l.b16 %v567
        %v1090 = vunpack.c.h.b16 %v567
        %v1091 = vunpack.c.l.b16 %v568
        %v1092 = vunpack.c.h.b16 %v568
        %v1093 = vunpack.c.l.b16 %v569
        %v1094 = vunpack.c.h.b16 %v569
        %v1095 = vunpack.c.l.b16 %v570
        %v1096 = vunpack.c.h.b16 %v570
        %v1097 = vunpack.c.l.b16 %v571
        %v1098 = vunpack.c.h.b16 %v571
        %v1099 = vunpack.c.l.b16 %v572
        %v1100 = vunpack.c.h.b16 %v572
        %v1101 = vpack.c.b16 %v911, %v909
        %v1102 = vpack.c.b16 %v912, %v910
        %v1103 = vpack.c.b16 %v915, %v913
        %v1104 = vpack.c.b16 %v916, %v914
        %v1105 = vpack.c.b16 %v919, %v917
        %v1106 = vpack.c.b16 %v920, %v918
        %v1107 = vpack.c.b16 %v923, %v921
        %v1108 = vpack.c.b16 %v924, %v922
        %v1109 = vpack.c.b16 %v927, %v925
        %v1110 = vpack.c.b16 %v928, %v926
        %v1111 = vpack.c.b16 %v931, %v929
        %v1112 = vpack.c.b16 %v932, %v930
        %v1113 = vpack.c.b16 %v935, %v933
        %v1114 = vpack.c.b16 %v936, %v934
        %v1115 = vpack.c.b16 %v939, %v937
        %v1116 = vpack.c.b16 %v940, %v938
        %v1117 = vpack.c.b16 %v943, %v941
        %v1118 = vpack.c.b16 %v944, %v942
        %v1119 = vpack.c.b16 %v947, %v945
        %v1120 = vpack.c.b16 %v948, %v946
        %v1121 = vpack.c.b16 %v951, %v949
        %v1122 = vpack.c.b16 %v952, %v950
        %v1123 = vpack.c.b16 %v955, %v953
        %v1124 = vpack.c.b16 %v956, %v954
        %v1125 = vpack.c.b16 %v959, %v957
        %v1126 = vpack.c.b16 %v960, %v958
        %v1127 = vpack.c.b16 %v963, %v961
        %v1128 = vpack.c.b16 %v964, %v962
        %v1129 = vpack.c.b16 %v967, %v965
        %v1130 = vpack.c.b16 %v968, %v966
        %v1131 = vpack.c.b16 %v971, %v969
        %v1132 = vpack.c.b16 %v972, %v970
        %v1133 = vpack.c.b16 %v975, %v973
        %v1134 = vpack.c.b16 %v976, %v974
        %v1135 = vpack.c.b16 %v979, %v977
        %v1136 = vpack.c.b16 %v980, %v978
        %v1137 = vpack.c.b16 %v983, %v981
        %v1138 = vpack.c.b16 %v984, %v982
        %v1139 = vpack.c.b16 %v987, %v985
        %v1140 = vpack.c.b16 %v988, %v986
        %v1141 = vpack.c.b16 %v991, %v989
        %v1142 = vpack.c.b16 %v992, %v990
        %v1143 = vpack.c.b16 %v995, %v993
        %v1144 = vpack.c.b16 %v996, %v994
        %v1145 = vpack.c.b16 %v999, %v997
        %v1146 = vpack.c.b16 %v1000, %v998
        %v1147 = vpack.c.b16 %v1003, %v1001
        %v1148 = vpack.c.b16 %v1004, %v1002
        %v1149 = vpack.c.b16 %v1007, %v1005
        %v1150 = vpack.c.b16 %v1008, %v1006
        %v1151 = vpack.c.b16 %v1011, %v1009
        %v1152 = vpack.c.b16 %v1012, %v1010
        %v1153 = vpack.c.b16 %v1015, %v1013
        %v1154 = vpack.c.b16 %v1016, %v1014
        %v1155 = vpack.c.b16 %v1019, %v1017
        %v1156 = vpack.c.b16 %v1020, %v1018
        %v1157 = vpack.c.b16 %v1023, %v1021
        %v1158 = vpack.c.b16 %v1024, %v1022
        %v1159 = vpack.c.b16 %v1027, %v1025
        %v1160 = vpack.c.b16 %v1028, %v1026
        %v1161 = vpack.c.b16 %v1031, %v1029
        %v1162 = vpack.c.b16 %v1032, %v1030
        %v1163 = vpack.c.b16 %v1035, %v1033
        %v1164 = vpack.c.b16 %v1036, %v1034
        %v1165 = vpack.c.b16 %v1039, %v1037
        %v1166 = vpack.c.b16 %v1040, %v1038
        %v1167 = vpack.c.b16 %v1043, %v1041
        %v1168 = vpack.c.b16 %v1044, %v1042
        %v1169 = vpack.c.b16 %v1047, %v1045
        %v1170 = vpack.c.b16 %v1048, %v1046
        %v1171 = vpack.c.b16 %v1051, %v1049
        %v1172 = vpack.c.b16 %v1052, %v1050
        %v1173 = vpack.c.b16 %v1055, %v1053
        %v1174 = vpack.c.b16 %v1056, %v1054
        %v1175 = vpack.c.b16 %v1059, %v1057
        %v1176 = vpack.c.b16 %v1060, %v1058
        %v1177 = vpack.c.b16 %v1063, %v1061
        %v1178 = vpack.c.b16 %v1064, %v1062
        %v1179 = vpack.c.b16 %v1067, %v1065
        %v1180 = vpack.c.b16 %v1068, %v1066
        %v1181 = vpack.c.b16 %v1071, %v1069
        %v1182 = vpack.c.b16 %v1072, %v1070
        %v1183 = vpack.c.b16 %v1075, %v1073
        %v1184 = vpack.c.b16 %v1076, %v1074
        %v1185 = vpack.c.b16 %v1079, %v1077
        %v1186 = vpack.c.b16 %v1080, %v1078
        %v1187 = vpack.c.b16 %v1083, %v1081
        %v1188 = vpack.c.b16 %v1084, %v1082
        %v1189 = vpack.c.b16 %v1087, %v1085
        %v1190 = vpack.c.b16 %v1088, %v1086
        %v1191 = vpack.c.b16 %v1091, %v1089
        %v1192 = vpack.c.b16 %v1092, %v1090
        %v1193 = vpack.c.b16 %v1095, %v1093
        %v1194 = vpack.c.b16 %v1096, %v1094
        %v1195 = vpack.c.b16 %v1099, %v1097
        %v1196 = vpack.c.b16 %v1100, %v1098
        %1293 = vmatprep.subr.bf16.mxu0 %v1102
        %1294 = vmatpush1.bf16.msra.mxu0 %v1101
        %1295 = vmatprep.subr.bf16.mxu0 %v1104
        %1296 = vmatpush1.bf16.msra.mxu0 %v1103
        %1297 = vmatprep.subr.bf16.mxu0 %v1106
        %1298 = vmatpush1.bf16.msra.mxu0 %v1105
        %1299 = vmatprep.subr.bf16.mxu0 %v1108
        %1300 = vmatpush1.bf16.msra.mxu0 %v1107
        %1301 = vmatprep.subr.bf16.mxu0 %v1110
        %1302 = vmatpush1.bf16.msra.mxu0 %v1109
        %1303 = vmatprep.subr.bf16.mxu0 %v1112
        %1304 = vmatpush1.bf16.msra.mxu0 %v1111
        %1305 = vmatprep.subr.bf16.mxu0 %v1114
        %1306 = vmatpush1.bf16.msra.mxu0 %v1113
        %1307 = vmatprep.subr.bf16.mxu0 %v1116
        %1308 = vmatpush1.bf16.msra.mxu0 %v1115
        %1309 = vmatprep.subr.bf16.mxu0 %v1118
        %1310 = vmatpush1.bf16.msra.mxu0 %v1117
        %1311 = vmatprep.subr.bf16.mxu0 %v1120
        %1312 = vmatpush1.bf16.msra.mxu0 %v1119
        %1313 = vmatprep.subr.bf16.mxu0 %v1122
        %1314 = vmatpush1.bf16.msra.mxu0 %v1121
        %1315 = vmatprep.subr.bf16.mxu0 %v1124
        %1316 = vmatpush1.bf16.msra.mxu0 %v1123
        %1317 = vmatprep.subr.bf16.mxu0 %v1126
        %1318 = vmatpush1.bf16.msra.mxu0 %v1125
        %1319 = vmatprep.subr.bf16.mxu0 %v1128
        %1320 = vmatpush1.bf16.msra.mxu0 %v1127
        %1321 = vmatprep.subr.bf16.mxu0 %v1130
        %1322 = vmatpush1.bf16.msra.mxu0 %v1129
        %1323 = vmatprep.subr.bf16.mxu0 %v1132
        %1324 = vmatpush1.bf16.msra.mxu0 %v1131
        %1325 = vmatprep.mubr.bf16.mxu0 %v718
        %1326 = vmatmul.mubr.bf16.gmra.mrb[0].mxu0 %v717
        %v1327 = vpop.f32.mrb[0].mxu0
        %v1328 = vadd.f32 0.0, %v1327
        %v1329 = vpop.f32.mrb[0].mxu0
        %v1330 = vadd.f32 0.0, %v1329
        %v1331 = vpop.f32.mrb[0].mxu0
        %v1332 = vadd.f32 0.0, %v1331
        %v1333 = vpop.f32.mrb[0].mxu0
        %v1334 = vadd.f32 0.0, %v1333
        %1335 = vmatprep.mubr.bf16.mxu0 %v724
        %1336 = vmatmul.mubr.bf16.gmra.mrb[0].mxu0 %v723
        %v1337 = vpop.f32.mrb[0].mxu0
        %v1338 = vadd.f32 0.0, %v1337
        %v1339 = vpop.f32.mrb[0].mxu0
        %v1340 = vadd.f32 0.0, %v1339
        %v1341 = vpop.f32.mrb[0].mxu0
        %v1342 = vadd.f32 0.0, %v1341
        %v1343 = vpop.f32.mrb[0].mxu0
        %v1344 = vadd.f32 0.0, %v1343
        %1345 = vmatprep.mubr.bf16.mxu0 %v730
        %1346 = vmatmul.mubr.bf16.gmra.mrb[0].mxu0 %v729
        %v1347 = vpop.f32.mrb[0].mxu0
        %v1348 = vadd.f32 0.0, %v1347
        %v1349 = vpop.f32.mrb[0].mxu0
        %v1350 = vadd.f32 0.0, %v1349
        %v1351 = vpop.f32.mrb[0].mxu0
        %v1352 = vadd.f32 0.0, %v1351
        %v1353 = vpop.f32.mrb[0].mxu0
        %v1354 = vadd.f32 0.0, %v1353
        %1355 = vmatprep.mubr.bf16.mxu0 %v736
        %1356 = vmatmul.mubr.bf16.gmra.mrb[0].mxu0 %v735
        %v1357 = vpop.f32.mrb[0].mxu0
        %v1358 = vadd.f32 0.0, %v1357
        %v1359 = vpop.f32.mrb[0].mxu0
        %v1360 = vadd.f32 0.0, %v1359
        %v1361 = vpop.f32.mrb[0].mxu0
        %v1362 = vadd.f32 0.0, %v1361
        %v1363 = vpop.f32.mrb[0].mxu0
        %v1364 = vadd.f32 0.0, %v1363
        %1365 = vmatprep.mubr.bf16.mxu0 %v742
        %1366 = vmatmul.mubr.bf16.gmra.mrb[0].mxu0 %v741
        %v1367 = vpop.f32.mrb[0].mxu0
        %v1368 = vadd.f32 0.0, %v1367
        %v1369 = vpop.f32.mrb[0].mxu0
        %v1370 = vadd.f32 0.0, %v1369
        %v1371 = vpop.f32.mrb[0].mxu0
        %v1372 = vadd.f32 0.0, %v1371
        %v1373 = vpop.f32.mrb[0].mxu0
        %v1374 = vadd.f32 0.0, %v1373
        %1375 = vmatprep.mubr.bf16.mxu0 %v748
        %1376 = vmatmul.mubr.bf16.gmra.mrb[0].mxu0 %v747
        %v1377 = vpop.f32.mrb[0].mxu0
        %v1378 = vadd.f32 0.0, %v1377
        %v1379 = vpop.f32.mrb[0].mxu0
        %v1380 = vadd.f32 0.0, %v1379
        %v1381 = vpop.f32.mrb[0].mxu0
        %v1382 = vadd.f32 0.0, %v1381
        %v1383 = vpop.f32.mrb[0].mxu0
        %v1384 = vadd.f32 0.0, %v1383
        %1385 = vmatprep.mubr.bf16.mxu0 %v754
        %1386 = vmatmul.mubr.bf16.gmra.mrb[0].mxu0 %v753
        %v1387 = vpop.f32.mrb[0].mxu0
        %v1388 = vadd.f32 0.0, %v1387
        %v1389 = vpop.f32.mrb[0].mxu0
        %v1390 = vadd.f32 0.0, %v1389
        %v1391 = vpop.f32.mrb[0].mxu0
        %v1392 = vadd.f32 0.0, %v1391
        %v1393 = vpop.f32.mrb[0].mxu0
        %v1394 = vadd.f32 0.0, %v1393
        %1395 = vmatprep.mubr.bf16.mxu0 %v760
        %1396 = vmatmul.mubr.bf16.gmra.mrb[0].mxu0 %v759
        %v1397 = vpop.f32.mrb[0].mxu0
        %v1398 = vadd.f32 0.0, %v1397
        %v1399 = vpop.f32.mrb[0].mxu0
        %v1400 = vadd.f32 0.0, %v1399
        %v1401 = vpop.f32.mrb[0].mxu0
        %v1402 = vadd.f32 0.0, %v1401
        %v1403 = vpop.f32.mrb[0].mxu0
        %v1404 = vadd.f32 0.0, %v1403
        %1405 = vdwg.mxu0
        %1406 = vmatprep.subr.bf16.mxu0 %v1134
        %1407 = vmatpush1.bf16.msra.mxu0 %v1133
        %1408 = vmatprep.subr.bf16.mxu0 %v1136
        %1409 = vmatpush1.bf16.msra.mxu0 %v1135
        %1410 = vmatprep.subr.bf16.mxu0 %v1138
        %1411 = vmatpush1.bf16.msra.mxu0 %v1137
        %1412 = vmatprep.subr.bf16.mxu0 %v1140
        %1413 = vmatpush1.bf16.msra.mxu0 %v1139
        %1414 = vmatprep.subr.bf16.mxu0 %v1142
        %1415 = vmatpush1.bf16.msra.mxu0 %v1141
        %1416 = vmatprep.subr.bf16.mxu0 %v1144
        %1417 = vmatpush1.bf16.msra.mxu0 %v1143
        %1418 = vmatprep.subr.bf16.mxu0 %v1146
        %1419 = vmatpush1.bf16.msra.mxu0 %v1145
        %1420 = vmatprep.subr.bf16.mxu0 %v1148
        %1421 = vmatpush1.bf16.msra.mxu0 %v1147
        %1422 = vmatprep.subr.bf16.mxu0 %v1150
        %1423 = vmatpush1.bf16.msra.mxu0 %v1149
        %1424 = vmatprep.subr.bf16.mxu0 %v1152
        %1425 = vmatpush1.bf16.msra.mxu0 %v1151
        %1426 = vmatprep.subr.bf16.mxu0 %v1154
        %1427 = vmatpush1.bf16.msra.mxu0 %v1153
        %1428 = vmatprep.subr.bf16.mxu0 %v1156
        %1429 = vmatpush1.bf16.msra.mxu0 %v1155
        %1430 = vmatprep.subr.bf16.mxu0 %v1158
        %1431 = vmatpush1.bf16.msra.mxu0 %v1157
        %1432 = vmatprep.subr.bf16.mxu0 %v1160
        %1433 = vmatpush1.bf16.msra.mxu0 %v1159
        %1434 = vmatprep.subr.bf16.mxu0 %v1162
        %1435 = vmatpush1.bf16.msra.mxu0 %v1161
        %1436 = vmatprep.subr.bf16.mxu0 %v1164
        %1437 = vmatpush1.bf16.msra.mxu0 %v1163
        %1438 = vmatprep.mubr.bf16.mxu0 %v720
        %1439 = vmatmul.mubr.bf16.gmra.mrb[0].mxu0 %v719
        %v1440 = vpop.f32.mrb[0].mxu0
        %v1441 = vadd.f32 %v1328, %v1440
        %v1442 = vpop.f32.mrb[0].mxu0
        %v1443 = vadd.f32 %v1330, %v1442
        %v1444 = vpop.f32.mrb[0].mxu0
        %v1445 = vadd.f32 %v1332, %v1444
        %v1446 = vpop.f32.mrb[0].mxu0
        %v1447 = vadd.f32 %v1334, %v1446
        %1448 = vmatprep.mubr.bf16.mxu0 %v726
        %1449 = vmatmul.mubr.bf16.gmra.mrb[0].mxu0 %v725
        %v1450 = vpop.f32.mrb[0].mxu0
        %v1451 = vadd.f32 %v1338, %v1450
        %v1452 = vpop.f32.mrb[0].mxu0
        %v1453 = vadd.f32 %v1340, %v1452
        %v1454 = vpop.f32.mrb[0].mxu0
        %v1455 = vadd.f32 %v1342, %v1454
        %v1456 = vpop.f32.mrb[0].mxu0
        %v1457 = vadd.f32 %v1344, %v1456
        %1458 = vmatprep.mubr.bf16.mxu0 %v732
        %1459 = vmatmul.mubr.bf16.gmra.mrb[0].mxu0 %v731
        %v1460 = vpop.f32.mrb[0].mxu0
        %v1461 = vadd.f32 %v1348, %v1460
        %v1462 = vpop.f32.mrb[0].mxu0
        %v1463 = vadd.f32 %v1350, %v1462
        %v1464 = vpop.f32.mrb[0].mxu0
        %v1465 = vadd.f32 %v1352, %v1464
        %v1466 = vpop.f32.mrb[0].mxu0
        %v1467 = vadd.f32 %v1354, %v1466
        %1468 = vmatprep.mubr.bf16.mxu0 %v738
        %1469 = vmatmul.mubr.bf16.gmra.mrb[0].mxu0 %v737
        %v1470 = vpop.f32.mrb[0].mxu0
        %v1471 = vadd.f32 %v1358, %v1470
        %v1472 = vpop.f32.mrb[0].mxu0
        %v1473 = vadd.f32 %v1360, %v1472
        %v1474 = vpop.f32.mrb[0].mxu0
        %v1475 = vadd.f32 %v1362, %v1474
        %v1476 = vpop.f32.mrb[0].mxu0
        %v1477 = vadd.f32 %v1364, %v1476
        %1478 = vmatprep.mubr.bf16.mxu0 %v744
        %1479 = vmatmul.mubr.bf16.gmra.mrb[0].mxu0 %v743
        %v1480 = vpop.f32.mrb[0].mxu0
        %v1481 = vadd.f32 %v1368, %v1480
        %v1482 = vpop.f32.mrb[0].mxu0
        %v1483 = vadd.f32 %v1370, %v1482
        %v1484 = vpop.f32.mrb[0].mxu0
        %v1485 = vadd.f32 %v1372, %v1484
        %v1486 = vpop.f32.mrb[0].mxu0
        %v1487 = vadd.f32 %v1374, %v1486
        %1488 = vmatprep.mubr.bf16.mxu0 %v750
        %1489 = vmatmul.mubr.bf16.gmra.mrb[0].mxu0 %v749
        %v1490 = vpop.f32.mrb[0].mxu0
        %v1491 = vadd.f32 %v1378, %v1490
        %v1492 = vpop.f32.mrb[0].mxu0
        %v1493 = vadd.f32 %v1380, %v1492
        %v1494 = vpop.f32.mrb[0].mxu0
        %v1495 = vadd.f32 %v1382, %v1494
        %v1496 = vpop.f32.mrb[0].mxu0
        %v1497 = vadd.f32 %v1384, %v1496
        %1498 = vmatprep.mubr.bf16.mxu0 %v756
        %1499 = vmatmul.mubr.bf16.gmra.mrb[0].mxu0 %v755
        %v1500 = vpop.f32.mrb[0].mxu0
        %v1501 = vadd.f32 %v1388, %v1500
        %v1502 = vpop.f32.mrb[0].mxu0
        %v1503 = vadd.f32 %v1390, %v1502
        %v1504 = vpop.f32.mrb[0].mxu0
        %v1505 = vadd.f32 %v1392, %v1504
        %v1506 = vpop.f32.mrb[0].mxu0
        %v1507 = vadd.f32 %v1394, %v1506
        %1508 = vmatprep.mubr.bf16.mxu0 %v762
        %1509 = vmatmul.mubr.bf16.gmra.mrb[0].mxu0 %v761
        %v1510 = vpop.f32.mrb[0].mxu0
        %v1511 = vadd.f32 %v1398, %v1510
        %v1512 = vpop.f32.mrb[0].mxu0
        %v1513 = vadd.f32 %v1400, %v1512
        %v1514 = vpop.f32.mrb[0].mxu0
        %v1515 = vadd.f32 %v1402, %v1514
        %v1516 = vpop.f32.mrb[0].mxu0
        %v1517 = vadd.f32 %v1404, %v1516
        %1518 = vdwg.mxu0
        %1519 = vmatprep.subr.bf16.mxu0 %v1166
        %1520 = vmatpush1.bf16.msra.mxu0 %v1165
        %1521 = vmatprep.subr.bf16.mxu0 %v1168
        %1522 = vmatpush1.bf16.msra.mxu0 %v1167
        %1523 = vmatprep.subr.bf16.mxu0 %v1170
        %1524 = vmatpush1.bf16.msra.mxu0 %v1169
        %1525 = vmatprep.subr.bf16.mxu0 %v1172
        %1526 = vmatpush1.bf16.msra.mxu0 %v1171
        %1527 = vmatprep.subr.bf16.mxu0 %v1174
        %1528 = vmatpush1.bf16.msra.mxu0 %v1173
        %1529 = vmatprep.subr.bf16.mxu0 %v1176
        %1530 = vmatpush1.bf16.msra.mxu0 %v1175
        %1531 = vmatprep.subr.bf16.mxu0 %v1178
        %1532 = vmatpush1.bf16.msra.mxu0 %v1177
        %1533 = vmatprep.subr.bf16.mxu0 %v1180
        %1534 = vmatpush1.bf16.msra.mxu0 %v1179
        %1535 = vmatprep.subr.bf16.mxu0 %v1182
        %1536 = vmatpush1.bf16.msra.mxu0 %v1181
        %1537 = vmatprep.subr.bf16.mxu0 %v1184
        %1538 = vmatpush1.bf16.msra.mxu0 %v1183
        %1539 = vmatprep.subr.bf16.mxu0 %v1186
        %1540 = vmatpush1.bf16.msra.mxu0 %v1185
        %1541 = vmatprep.subr.bf16.mxu0 %v1188
        %1542 = vmatpush1.bf16.msra.mxu0 %v1187
        %1543 = vmatprep.subr.bf16.mxu0 %v1190
        %1544 = vmatpush1.bf16.msra.mxu0 %v1189
        %1545 = vmatprep.subr.bf16.mxu0 %v1192
        %1546 = vmatpush1.bf16.msra.mxu0 %v1191
        %1547 = vmatprep.subr.bf16.mxu0 %v1194
        %1548 = vmatpush1.bf16.msra.mxu0 %v1193
        %1549 = vmatprep.subr.bf16.mxu0 %v1196
        %1550 = vmatpush1.bf16.msra.mxu0 %v1195
        %1551 = vmatprep.mubr.bf16.mxu0 %v722
        %1552 = vmatmul.mubr.bf16.gmra.mrb[0].mxu0 %v721
        %v1553 = vpop.f32.mrb[0].mxu0
        %v1554 = vadd.f32 %v1441, %v1553
        %v1555 = vpop.f32.mrb[0].mxu0
        %v1556 = vadd.f32 %v1443, %v1555
        %v1557 = vpop.f32.mrb[0].mxu0
        %v1558 = vadd.f32 %v1445, %v1557
        %v1559 = vpop.f32.mrb[0].mxu0
        %v1560 = vadd.f32 %v1447, %v1559
        %1561 = vmatprep.mubr.bf16.mxu0 %v728
        %1562 = vmatmul.mubr.bf16.gmra.mrb[0].mxu0 %v727
        %v1563 = vpop.f32.mrb[0].mxu0
        %v1564 = vadd.f32 %v1451, %v1563
        %v1565 = vpop.f32.mrb[0].mxu0
        %v1566 = vadd.f32 %v1453, %v1565
        %v1567 = vpop.f32.mrb[0].mxu0
        %v1568 = vadd.f32 %v1455, %v1567
        %v1569 = vpop.f32.mrb[0].mxu0
        %v1570 = vadd.f32 %v1457, %v1569
        %1571 = vmatprep.mubr.bf16.mxu0 %v734
        %1572 = vmatmul.mubr.bf16.gmra.mrb[0].mxu0 %v733
        %v1573 = vpop.f32.mrb[0].mxu0
        %v1574 = vadd.f32 %v1461, %v1573
        %v1575 = vpop.f32.mrb[0].mxu0
        %v1576 = vadd.f32 %v1463, %v1575
        %v1577 = vpop.f32.mrb[0].mxu0
        %v1578 = vadd.f32 %v1465, %v1577
        %v1579 = vpop.f32.mrb[0].mxu0
        %v1580 = vadd.f32 %v1467, %v1579
        %1581 = vmatprep.mubr.bf16.mxu0 %v740
        %1582 = vmatmul.mubr.bf16.gmra.mrb[0].mxu0 %v739
        %v1583 = vpop.f32.mrb[0].mxu0
        %v1584 = vadd.f32 %v1471, %v1583
        %v1585 = vpop.f32.mrb[0].mxu0
        %v1586 = vadd.f32 %v1473, %v1585
        %v1587 = vpop.f32.mrb[0].mxu0
        %v1588 = vadd.f32 %v1475, %v1587
        %v1589 = vpop.f32.mrb[0].mxu0
        %v1590 = vadd.f32 %v1477, %v1589
        %1591 = vmatprep.mubr.bf16.mxu0 %v746
        %1592 = vmatmul.mubr.bf16.gmra.mrb[0].mxu0 %v745
        %v1593 = vpop.f32.mrb[0].mxu0
        %v1594 = vadd.f32 %v1481, %v1593
        %v1595 = vpop.f32.mrb[0].mxu0
        %v1596 = vadd.f32 %v1483, %v1595
        %v1597 = vpop.f32.mrb[0].mxu0
        %v1598 = vadd.f32 %v1485, %v1597
        %v1599 = vpop.f32.mrb[0].mxu0
        %v1600 = vadd.f32 %v1487, %v1599
        %1601 = vmatprep.mubr.bf16.mxu0 %v752
        %1602 = vmatmul.mubr.bf16.gmra.mrb[0].mxu0 %v751
        %v1603 = vpop.f32.mrb[0].mxu0
        %v1604 = vadd.f32 %v1491, %v1603
        %v1605 = vpop.f32.mrb[0].mxu0
        %v1606 = vadd.f32 %v1493, %v1605
        %v1607 = vpop.f32.mrb[0].mxu0
        %v1608 = vadd.f32 %v1495, %v1607
        %v1609 = vpop.f32.mrb[0].mxu0
        %v1610 = vadd.f32 %v1497, %v1609
        %1611 = vmatprep.mubr.bf16.mxu0 %v758
        %1612 = vmatmul.mubr.bf16.gmra.mrb[0].mxu0 %v757
        %v1613 = vpop.f32.mrb[0].mxu0
        %v1614 = vadd.f32 %v1501, %v1613
        %v1615 = vpop.f32.mrb[0].mxu0
        %v1616 = vadd.f32 %v1503, %v1615
        %v1617 = vpop.f32.mrb[0].mxu0
        %v1618 = vadd.f32 %v1505, %v1617
        %v1619 = vpop.f32.mrb[0].mxu0
        %v1620 = vadd.f32 %v1507, %v1619
        %1621 = vmatprep.mubr.bf16.mxu0 %v764
        %1622 = vmatmul.mubr.bf16.gmra.mrb[0].mxu0 %v763
        %v1623 = vpop.f32.mrb[0].mxu0
        %v1624 = vadd.f32 %v1511, %v1623
        %v1625 = vpop.f32.mrb[0].mxu0
        %v1626 = vadd.f32 %v1513, %v1625
        %v1627 = vpop.f32.mrb[0].mxu0
        %v1628 = vadd.f32 %v1515, %v1627
        %v1629 = vpop.f32.mrb[0].mxu0
        %v1630 = vadd.f32 %v1517, %v1629
        %1631 = vdwg.mxu0
        %v1632 = vadd.f32 %v397, %v1554
        %v1633 = vadd.f32 %v398, %v1556
        %v1634 = vadd.f32 %v399, %v1558
        %v1635 = vadd.f32 %v400, %v1560
        %v1636 = vadd.f32 %v401, %v1564
        %v1637 = vadd.f32 %v402, %v1566
        %v1638 = vadd.f32 %v403, %v1568
        %v1639 = vadd.f32 %v404, %v1570
        %v1640 = vadd.f32 %v405, %v1574
        %v1641 = vadd.f32 %v406, %v1576
        %v1642 = vadd.f32 %v407, %v1578
        %v1643 = vadd.f32 %v408, %v1580
        %v1644 = vadd.f32 %v409, %v1584
        %v1645 = vadd.f32 %v410, %v1586
        %v1646 = vadd.f32 %v411, %v1588
        %v1647 = vadd.f32 %v412, %v1590
        %v1648 = vadd.f32 %v413, %v1594
        %v1649 = vadd.f32 %v414, %v1596
        %v1650 = vadd.f32 %v415, %v1598
        %v1651 = vadd.f32 %v416, %v1600
        %v1652 = vadd.f32 %v417, %v1604
        %v1653 = vadd.f32 %v418, %v1606
        %v1654 = vadd.f32 %v419, %v1608
        %v1655 = vadd.f32 %v420, %v1610
        %v1656 = vadd.f32 %v421, %v1614
        %v1657 = vadd.f32 %v422, %v1616
        %v1658 = vadd.f32 %v423, %v1618
        %v1659 = vadd.f32 %v424, %v1620
        %v1660 = vadd.f32 %v425, %v1624
        %v1661 = vadd.f32 %v426, %v1626
        %v1662 = vadd.f32 %v427, %v1628
        %v1663 = vadd.f32 %v428, %v1630
        %1664 = vst [vmem:[#allocation2] sm:$0xff] %v1632
        %1665 = vst [vmem:[#allocation2 + $0x8] sm:$0xff] %v1633
        %1666 = vst [vmem:[#allocation2 + $0x10] sm:$0xff] %v1634
        %1667 = vst [vmem:[#allocation2 + $0x18] sm:$0xff] %v1635
        %1668 = vst [vmem:[#allocation2 + $0x20] sm:$0xff] %v1636
        %1669 = vst [vmem:[#allocation2 + $0x28] sm:$0xff] %v1637
        %1670 = vst [vmem:[#allocation2 + $0x30] sm:$0xff] %v1638
        %1671 = vst [vmem:[#allocation2 + $0x38] sm:$0xff] %v1639
        %1672 = vst [vmem:[#allocation2 + $0x40] sm:$0xff] %v1640
        %1673 = vst [vmem:[#allocation2 + $0x48] sm:$0xff] %v1641
        %1674 = vst [vmem:[#allocation2 + $0x50] sm:$0xff] %v1642
        %1675 = vst [vmem:[#allocation2 + $0x58] sm:$0xff] %v1643
        %1676 = vst [vmem:[#allocation2 + $0x60] sm:$0xff] %v1644
        %1677 = vst [vmem:[#allocation2 + $0x68] sm:$0xff] %v1645
        %1678 = vst [vmem:[#allocation2 + $0x70] sm:$0xff] %v1646
        %1679 = vst [vmem:[#allocation2 + $0x78] sm:$0xff] %v1647
        %1680 = vst [vmem:[#allocation2 + $0x80] sm:$0xff] %v1648
        %1681 = vst [vmem:[#allocation2 + $0x88] sm:$0xff] %v1649
        %1682 = vst [vmem:[#allocation2 + $0x90] sm:$0xff] %v1650
        %1683 = vst [vmem:[#allocation2 + $0x98] sm:$0xff] %v1651
        %1684 = vst [vmem:[#allocation2 + $0xa0] sm:$0xff] %v1652
        %1685 = vst [vmem:[#allocation2 + $0xa8] sm:$0xff] %v1653
        %1686 = vst [vmem:[#allocation2 + $0xb0] sm:$0xff] %v1654
        %1687 = vst [vmem:[#allocation2 + $0xb8] sm:$0xff] %v1655
        %1688 = vst [vmem:[#allocation2 + $0xc0] sm:$0xff] %v1656
        %1689 = vst [vmem:[#allocation2 + $0xc8] sm:$0xff] %v1657
        %1690 = vst [vmem:[#allocation2 + $0xd0] sm:$0xff] %v1658
        %1691 = vst [vmem:[#allocation2 + $0xd8] sm:$0xff] %v1659
        %1692 = vst [vmem:[#allocation2 + $0xe0] sm:$0xff] %v1660
        %1693 = vst [vmem:[#allocation2 + $0xe8] sm:$0xff] %v1661
        %1694 = vst [vmem:[#allocation2 + $0xf0] sm:$0xff] %v1662
        %1695 = vst [vmem:[#allocation2 + $0xf8] sm:$0xff] %v1663
        %p1696 = scmp.eq.s32.totalorder %s34, 2
        // Predicated region
        $region57: #{tpu_custom_call.1} parent=35 // pred_check
          %p1697 = pneg %p1696
        $region58: #{tpu_custom_call.1} parent=35 // pred_check_branch
          %1699 = sbr.rel (%p1697) target = $region60
        $region59: #{tpu_custom_call.1} parent=35 // pred_region
          %v1700 = vld [vmem:[#allocation2] sm:$0xff]
          %v1701 = vld [vmem:[#allocation2 + $0x8] sm:$0xff]
          %v1702 = vld [vmem:[#allocation2 + $0x10] sm:$0xff]
          %v1703 = vld [vmem:[#allocation2 + $0x18] sm:$0xff]
          %v1704 = vld [vmem:[#allocation2 + $0x20] sm:$0xff]
          %v1705 = vld [vmem:[#allocation2 + $0x28] sm:$0xff]
          %v1706 = vld [vmem:[#allocation2 + $0x30] sm:$0xff]
          %v1707 = vld [vmem:[#allocation2 + $0x38] sm:$0xff]
          %v1708 = vld [vmem:[#allocation2 + $0x40] sm:$0xff]
          %v1709 = vld [vmem:[#allocation2 + $0x48] sm:$0xff]
          %v1710 = vld [vmem:[#allocation2 + $0x50] sm:$0xff]
          %v1711 = vld [vmem:[#allocation2 + $0x58] sm:$0xff]
          %v1712 = vld [vmem:[#allocation2 + $0x60] sm:$0xff]
          %v1713 = vld [vmem:[#allocation2 + $0x68] sm:$0xff]
          %v1714 = vld [vmem:[#allocation2 + $0x70] sm:$0xff]
          %v1715 = vld [vmem:[#allocation2 + $0x78] sm:$0xff]
          %v1716 = vld [vmem:[#allocation2 + $0x80] sm:$0xff]
          %v1717 = vld [vmem:[#allocation2 + $0x88] sm:$0xff]
          %v1718 = vld [vmem:[#allocation2 + $0x90] sm:$0xff]
          %v1719 = vld [vmem:[#allocation2 + $0x98] sm:$0xff]
          %v1720 = vld [vmem:[#allocation2 + $0xa0] sm:$0xff]
          %v1721 = vld [vmem:[#allocation2 + $0xa8] sm:$0xff]
          %v1722 = vld [vmem:[#allocation2 + $0xb0] sm:$0xff]
          %v1723 = vld [vmem:[#allocation2 + $0xb8] sm:$0xff]
          %v1724 = vld [vmem:[#allocation2 + $0xc0] sm:$0xff]
          %v1725 = vld [vmem:[#allocation2 + $0xc8] sm:$0xff]
          %v1726 = vld [vmem:[#allocation2 + $0xd0] sm:$0xff]
          %v1727 = vld [vmem:[#allocation2 + $0xd8] sm:$0xff]
          %v1728 = vld [vmem:[#allocation2 + $0xe0] sm:$0xff]
          %v1729 = vld [vmem:[#allocation2 + $0xe8] sm:$0xff]
          %v1730 = vld [vmem:[#allocation2 + $0xf0] sm:$0xff]
          %v1731 = vld [vmem:[#allocation2 + $0xf8] sm:$0xff]
          %v1732 = vld [vmem:[#allocation8] sm:$0x3]
          %v1734 = vlaneseq
          %v1735 = vshrl.u32 %v1734, 7
          %v1736 = vsub.s32 0, %v1735
          %v1737 = vrot.slane %v1732, %v1736
          %v1738 = vlaneseq
          %v1739 = vshrl.u32 %v1738, 7
          %v1740 = vsub.s32 1, %v1739
          %v1741 = vrot.slane %v1732, %v1740
          %v1744 = vadd.f32 %v1700, %v1737
          %v1745 = vadd.f32 %v1701, %v1741
          %v1746 = vadd.f32 %v1702, %v1737
          %v1747 = vadd.f32 %v1703, %v1741
          %v1748 = vadd.f32 %v1704, %v1737
          %v1749 = vadd.f32 %v1705, %v1741
          %v1750 = vadd.f32 %v1706, %v1737
          %v1751 = vadd.f32 %v1707, %v1741
          %v1752 = vadd.f32 %v1708, %v1737
          %v1753 = vadd.f32 %v1709, %v1741
          %v1754 = vadd.f32 %v1710, %v1737
          %v1755 = vadd.f32 %v1711, %v1741
          %v1756 = vadd.f32 %v1712, %v1737
          %v1757 = vadd.f32 %v1713, %v1741
          %v1758 = vadd.f32 %v1714, %v1737
          %v1759 = vadd.f32 %v1715, %v1741
          %v1760 = vadd.f32 %v1716, %v1737
          %v1761 = vadd.f32 %v1717, %v1741
          %v1762 = vadd.f32 %v1718, %v1737
          %v1763 = vadd.f32 %v1719, %v1741
          %v1764 = vadd.f32 %v1720, %v1737
          %v1765 = vadd.f32 %v1721, %v1741
          %v1766 = vadd.f32 %v1722, %v1737
          %v1767 = vadd.f32 %v1723, %v1741
          %v1768 = vadd.f32 %v1724, %v1737
          %v1769 = vadd.f32 %v1725, %v1741
          %v1770 = vadd.f32 %v1726, %v1737
          %v1771 = vadd.f32 %v1727, %v1741
          %v1772 = vadd.f32 %v1728, %v1737
          %v1773 = vadd.f32 %v1729, %v1741
          %v1774 = vadd.f32 %v1730, %v1737
          %v1775 = vadd.f32 %v1731, %v1741
          %v1776 = vld [vmem:[%s317] sm:$0xff]
          %v1777 = vld [vmem:[%s317 + $0x8] sm:$0xff]
          %v1778 = vld [vmem:[%s317 + $0x10] sm:$0xff]
          %v1779 = vld [vmem:[%s317 + $0x18] sm:$0xff]
          %v1780 = vld [vmem:[%s317 + $0x20] sm:$0xff]
          %v1781 = vld [vmem:[%s317 + $0x28] sm:$0xff]
          %v1782 = vld [vmem:[%s317 + $0x30] sm:$0xff]
          %v1783 = vld [vmem:[%s317 + $0x38] sm:$0xff]
          %v1784 = vld [vmem:[%s317 + $0x40] sm:$0xff]
          %v1785 = vld [vmem:[%s317 + $0x48] sm:$0xff]
          %v1786 = vld [vmem:[%s317 + $0x50] sm:$0xff]
          %v1787 = vld [vmem:[%s317 + $0x58] sm:$0xff]
          %v1788 = vld [vmem:[%s317 + $0x60] sm:$0xff]
          %v1789 = vld [vmem:[%s317 + $0x68] sm:$0xff]
          %v1790 = vld [vmem:[%s317 + $0x70] sm:$0xff]
          %v1791 = vld [vmem:[%s317 + $0x78] sm:$0xff]
          %v1792 = vunpack.c.l.bf16 %v1776
          %v1793 = vunpack.c.h.bf16 %v1776
          %v1794 = vunpack.c.l.bf16 %v1777
          %v1795 = vunpack.c.h.bf16 %v1777
          %v1796 = vunpack.c.l.bf16 %v1778
          %v1797 = vunpack.c.h.bf16 %v1778
          %v1798 = vunpack.c.l.bf16 %v1779
          %v1799 = vunpack.c.h.bf16 %v1779
          %v1800 = vunpack.c.l.bf16 %v1780
          %v1801 = vunpack.c.h.bf16 %v1780
          %v1802 = vunpack.c.l.bf16 %v1781
          %v1803 = vunpack.c.h.bf16 %v1781
          %v1804 = vunpack.c.l.bf16 %v1782
          %v1805 = vunpack.c.h.bf16 %v1782
          %v1806 = vunpack.c.l.bf16 %v1783
          %v1807 = vunpack.c.h.bf16 %v1783
          %v1808 = vunpack.c.l.bf16 %v1784
          %v1809 = vunpack.c.h.bf16 %v1784
          %v1810 = vunpack.c.l.bf16 %v1785
          %v1811 = vunpack.c.h.bf16 %v1785
          %v1812 = vunpack.c.l.bf16 %v1786
          %v1813 = vunpack.c.h.bf16 %v1786
          %v1814 = vunpack.c.l.bf16 %v1787
          %v1815 = vunpack.c.h.bf16 %v1787
          %v1816 = vunpack.c.l.bf16 %v1788
          %v1817 = vunpack.c.h.bf16 %v1788
          %v1818 = vunpack.c.l.bf16 %v1789
          %v1819 = vunpack.c.h.bf16 %v1789
          %v1820 = vunpack.c.l.bf16 %v1790
          %v1821 = vunpack.c.h.bf16 %v1790
          %v1822 = vunpack.c.l.bf16 %v1791
          %v1823 = vunpack.c.h.bf16 %v1791
          %v1824 = vadd.f32 %v1744, %v1792
          %v1825 = vadd.f32 %v1745, %v1793
          %v1826 = vadd.f32 %v1746, %v1794
          %v1827 = vadd.f32 %v1747, %v1795
          %v1828 = vadd.f32 %v1748, %v1796
          %v1829 = vadd.f32 %v1749, %v1797
          %v1830 = vadd.f32 %v1750, %v1798
          %v1831 = vadd.f32 %v1751, %v1799
          %v1832 = vadd.f32 %v1752, %v1800
          %v1833 = vadd.f32 %v1753, %v1801
          %v1834 = vadd.f32 %v1754, %v1802
          %v1835 = vadd.f32 %v1755, %v1803
          %v1836 = vadd.f32 %v1756, %v1804
          %v1837 = vadd.f32 %v1757, %v1805
          %v1838 = vadd.f32 %v1758, %v1806
          %v1839 = vadd.f32 %v1759, %v1807
          %v1840 = vadd.f32 %v1760, %v1808
          %v1841 = vadd.f32 %v1761, %v1809
          %v1842 = vadd.f32 %v1762, %v1810
          %v1843 = vadd.f32 %v1763, %v1811
          %v1844 = vadd.f32 %v1764, %v1812
          %v1845 = vadd.f32 %v1765, %v1813
          %v1846 = vadd.f32 %v1766, %v1814
          %v1847 = vadd.f32 %v1767, %v1815
          %v1848 = vadd.f32 %v1768, %v1816
          %v1849 = vadd.f32 %v1769, %v1817
          %v1850 = vadd.f32 %v1770, %v1818
          %v1851 = vadd.f32 %v1771, %v1819
          %v1852 = vadd.f32 %v1772, %v1820
          %v1853 = vadd.f32 %v1773, %v1821
          %v1854 = vadd.f32 %v1774, %v1822
          %v1855 = vadd.f32 %v1775, %v1823
          %v1856 = vmax.f32 %v1824, 0.0
          %v1857 = vmax.f32 %v1825, 0.0
          %v1858 = vmax.f32 %v1826, 0.0
          %v1859 = vmax.f32 %v1827, 0.0
          %v1860 = vmax.f32 %v1828, 0.0
          %v1861 = vmax.f32 %v1829, 0.0
          %v1862 = vmax.f32 %v1830, 0.0
          %v1863 = vmax.f32 %v1831, 0.0
          %v1864 = vmax.f32 %v1832, 0.0
          %v1865 = vmax.f32 %v1833, 0.0
          %v1866 = vmax.f32 %v1834, 0.0
          %v1867 = vmax.f32 %v1835, 0.0
          %v1868 = vmax.f32 %v1836, 0.0
          %v1869 = vmax.f32 %v1837, 0.0
          %v1870 = vmax.f32 %v1838, 0.0
          %v1871 = vmax.f32 %v1839, 0.0
          %v1872 = vmax.f32 %v1840, 0.0
          %v1873 = vmax.f32 %v1841, 0.0
          %v1874 = vmax.f32 %v1842, 0.0
          %v1875 = vmax.f32 %v1843, 0.0
          %v1876 = vmax.f32 %v1844, 0.0
          %v1877 = vmax.f32 %v1845, 0.0
          %v1878 = vmax.f32 %v1846, 0.0
          %v1879 = vmax.f32 %v1847, 0.0
          %v1880 = vmax.f32 %v1848, 0.0
          %v1881 = vmax.f32 %v1849, 0.0
          %v1882 = vmax.f32 %v1850, 0.0
          %v1883 = vmax.f32 %v1851, 0.0
          %v1884 = vmax.f32 %v1852, 0.0
          %v1885 = vmax.f32 %v1853, 0.0
          %v1886 = vmax.f32 %v1854, 0.0
          %v1887 = vmax.f32 %v1855, 0.0
          %v1888 = vpack.c.bf16 %v1858, %v1856
          %v1889 = vpack.c.bf16 %v1859, %v1857
          %v1890 = vpack.c.bf16 %v1862, %v1860
          %v1891 = vpack.c.bf16 %v1863, %v1861
          %v1892 = vpack.c.bf16 %v1866, %v1864
          %v1893 = vpack.c.bf16 %v1867, %v1865
          %v1894 = vpack.c.bf16 %v1870, %v1868
          %v1895 = vpack.c.bf16 %v1871, %v1869
          %v1896 = vpack.c.bf16 %v1874, %v1872
          %v1897 = vpack.c.bf16 %v1875, %v1873
          %v1898 = vpack.c.bf16 %v1878, %v1876
          %v1899 = vpack.c.bf16 %v1879, %v1877
          %v1900 = vpack.c.bf16 %v1882, %v1880
          %v1901 = vpack.c.bf16 %v1883, %v1881
          %v1902 = vpack.c.bf16 %v1886, %v1884
          %v1903 = vpack.c.bf16 %v1887, %v1885
          %v1920 = vunpack.c.l.b16 %v1888
          %v1921 = vunpack.c.l.b16 %v1889
          %v1922 = vunpack.c.h.b16 %v1888
          %v1923 = vunpack.c.h.b16 %v1889
          %v1924 = vunpack.c.l.b16 %v1890
          %v1925 = vunpack.c.l.b16 %v1891
          %v1926 = vunpack.c.h.b16 %v1890
          %v1927 = vunpack.c.h.b16 %v1891
          %v1928 = vunpack.c.l.b16 %v1892
          %v1929 = vunpack.c.l.b16 %v1893
          %v1930 = vunpack.c.h.b16 %v1892
          %v1931 = vunpack.c.h.b16 %v1893
          %v1932 = vunpack.c.l.b16 %v1894
          %v1933 = vunpack.c.l.b16 %v1895
          %v1934 = vunpack.c.h.b16 %v1894
          %v1935 = vunpack.c.h.b16 %v1895
          %v1936 = vunpack.c.l.b16 %v1896
          %v1937 = vunpack.c.l.b16 %v1897
          %v1938 = vunpack.c.h.b16 %v1896
          %v1939 = vunpack.c.h.b16 %v1897
          %v1940 = vunpack.c.l.b16 %v1898
          %v1941 = vunpack.c.l.b16 %v1899
          %v1942 = vunpack.c.h.b16 %v1898
          %v1943 = vunpack.c.h.b16 %v1899
          %v1944 = vunpack.c.l.b16 %v1900
          %v1945 = vunpack.c.l.b16 %v1901
          %v1946 = vunpack.c.h.b16 %v1900
          %v1947 = vunpack.c.h.b16 %v1901
          %v1948 = vunpack.c.l.b16 %v1902
          %v1949 = vunpack.c.l.b16 %v1903
          %v1950 = vunpack.c.h.b16 %v1902
          %v1951 = vunpack.c.h.b16 %v1903
          %v1952 = vpack.c.b16 %v1921, %v1920
          %v1953 = vpack.c.b16 %v1923, %v1922
          %v1954 = vpack.c.b16 %v1925, %v1924
          %v1955 = vpack.c.b16 %v1927, %v1926
          %v1956 = vpack.c.b16 %v1929, %v1928
          %v1957 = vpack.c.b16 %v1931, %v1930
          %v1958 = vpack.c.b16 %v1933, %v1932
          %v1959 = vpack.c.b16 %v1935, %v1934
          %v1960 = vpack.c.b16 %v1937, %v1936
          %v1961 = vpack.c.b16 %v1939, %v1938
          %v1962 = vpack.c.b16 %v1941, %v1940
          %v1963 = vpack.c.b16 %v1943, %v1942
          %v1964 = vpack.c.b16 %v1945, %v1944
          %v1965 = vpack.c.b16 %v1947, %v1946
          %v1966 = vpack.c.b16 %v1949, %v1948
          %v1967 = vpack.c.b16 %v1951, %v1950
          %1984 = vst [vmem:[%s351] sm:$0xff] %v1952
          %1985 = vst [vmem:[%s351 + $0x8] sm:$0xff] %v1953
          %1986 = vst [vmem:[%s351 + $0x10] sm:$0xff] %v1954
          %1987 = vst [vmem:[%s351 + $0x18] sm:$0xff] %v1955
          %1988 = vst [vmem:[%s351 + $0x20] sm:$0xff] %v1956
          %1989 = vst [vmem:[%s351 + $0x28] sm:$0xff] %v1957
          %1990 = vst [vmem:[%s351 + $0x30] sm:$0xff] %v1958
          %1991 = vst [vmem:[%s351 + $0x38] sm:$0xff] %v1959
          %1992 = vst [vmem:[%s351 + $0x40] sm:$0xff] %v1960
          %1993 = vst [vmem:[%s351 + $0x48] sm:$0xff] %v1961
          %1994 = vst [vmem:[%s351 + $0x50] sm:$0xff] %v1962
          %1995 = vst [vmem:[%s351 + $0x58] sm:$0xff] %v1963
          %1996 = vst [vmem:[%s351 + $0x60] sm:$0xff] %v1964
          %1997 = vst [vmem:[%s351 + $0x68] sm:$0xff] %v1965
          %1998 = vst [vmem:[%s351 + $0x70] sm:$0xff] %v1966
          %1999 = vst [vmem:[%s351 + $0x78] sm:$0xff] %v1967
        $region60: #{tpu_custom_call.1} parent=35 // pred_fallthru
          _
        %s2000 = sand.u32 %s166, 1
        %s2001 = scalar_lea.sflag [#allocation5], %s2000
        %s2002 = sand.u32 %s166, 1
        %s2003 = smul.addr %s2002, 128
        %s2004 = scalar_lea.vmem [#allocation11], %s2003
        // Predicated region
        $region61: #{tpu_custom_call.1} parent=35 // pred_check
          %p2005 = pneg %p176
        $region62: #{tpu_custom_call.1} parent=35 // pred_check_branch
          %2007 = sbr.rel (%p2005) target = $region64
        $region63: #{tpu_custom_call.1} parent=35 // pred_region
          %s2008 = smul.u32 16, %s32
          %s2009 = smul.u32 2, %s33
          %s2011 = ssub.s32 2048, 2048
          %2012 = vsyncadd %s2001, %s2011
          %s2013 = smul.addr %s2008, 2
          %s2014 = sadd.s32 %s2009, %s2013
          %s2015 = smul.addr %s2014, 64
          %s2016 = scalar_lea.hbm %s4, %s2015
          %s2017 = sshll.u32 %s2004, 4
          %s2018 = int_to_ptr.vmem [resolvable:$true] %s2017
          %2023 = dma.vmem_to_hbm [thread:$0]  %s2018, 2048, %s2016, %s2001, 128, 128, 8
        $region64: #{tpu_custom_call.1} parent=35 // pred_fallthru
          _
      $region36: #{tpu_custom_call.1} parent=5 // pred_fallthru
        _
      %p2024 = scmp.le.s32.totalorder 2, %s22
      // Predicated region
      $region65: #{tpu_custom_call.1} parent=5 // pred_check
        %p2025 = pneg %p2024
      $region66: #{tpu_custom_call.1} parent=5 // pred_check_branch
        %2027 = sbr.rel (%p2025) target = $region68
      $region67: #{tpu_custom_call.1} parent=5 // pred_region
        %s2028 = ssub.s32 %s22, 2
        // Predicated region
        $region69: #{tpu_custom_call.1} parent=67 // pred_check
          %p2029 = pneg %p182
        $region70: #{tpu_custom_call.1} parent=67 // pred_check_branch
          %2031 = sbr.rel (%p2029) target = $region72
        $region71: #{tpu_custom_call.1} parent=67 // pred_region
          %s2032 = sand.u32 %s167, 1
          %s2033 = scalar_lea.sflag [#allocation5], %s2032
          %s2034 = sand.u32 %s167, 1
          %s2035 = smul.addr %s2034, 128
          %s2036 = scalar_lea.vmem [#allocation11], %s2035
          %2037 = dma.done %s2033, 2048
        $region72: #{tpu_custom_call.1} parent=67 // pred_fallthru
          _
      $region68: #{tpu_custom_call.1} parent=5 // pred_fallthru
        _
    $region6: #{tpu_custom_call.1} parent=1 // loop_footer
      %s26 = sadd.s32 1, %s22
    $region7: #{tpu_custom_call.1} parent=1 // loop_footer_branch
      %21 = sbr.rel target = $region3
    $region8: #{tpu_custom_call.1} parent=1 // loop_exit
      _
    %2038 = vsyncpa [#allocation4], 1
    %s2039 = scalar_lea.sflag [#allocation4], 1
    %2040 = vsyncpa %s2039, 1
    %2041 = vsyncpa [#allocation7], 1
    %s2042 = scalar_lea.sflag [#allocation7], 1
    %2043 = vsyncpa %s2042, 1
    %2044 = vsyncpa [#allocation10], 1
    %s2045 = scalar_lea.sflag [#allocation10], 1
    %2046 = vsyncpa %s2045, 1
    %2047 = vsyncpa [#allocation5], 1
    %s2048 = scalar_lea.sflag [#allocation5], 1
    %2049 = vsyncpa %s2048, 1

</llo_original>
